<compile_context>
chip_gen: v6e
topology: v6e:2x2x1
jax: 0.10.0
libtpu: 0.0.40
codegen_flags: <defaults>
</compile_context>

<pallas_src>
import functools

import jax
import jax.numpy as jnp
import numpy as np
from jax.experimental import pallas as pl
from jax.experimental.pallas import tpu as pltpu

_INV_SQRT2 = 0.7071067811865476
_VMEM_LIMIT = 48 * 1024 * 1024   # explicit scoped-VMEM budget (headroom on v7x's 64 MiB)


def _gelu(z):
    # exact (erf-based) GELU, same as torch.nn.GELU()
    return 0.5 * z * (1.0 + jax.lax.erf(z * _INV_SQRT2))


# --------------------- pass 1: depthwise 3x3 / stride 2 ---------------------
def _dw_kernel(x_ref, w_ref, y_ref, s_ref, ss_ref, *, mult, ho, wo):
    # x_ref : (1, 4, Cin, Ho+1, Wo+1)  parity planes of the padded input
    # w_ref : (9, mult, Cin, 1, 1)     depthwise weights, [tap, j, ci]
    # y_ref : (mult, Cin, 1, Ho, Wo)   depthwise output (grouped channel order)
    # s_ref / ss_ref : (1, mult, Cin, 1, 1)  partial BN1 sum / sum-of-squares
    for j in range(mult):
        acc = None
        for kh in range(3):
            for kw in range(3):
                p = (kh % 2) * 2 + (kw % 2)          # which parity plane
                dh, dw = kh // 2, kw // 2            # unit-stride shift inside it
                tap = x_ref[0, p, :, dh:dh + ho, dw:dw + wo]      # (Cin, Ho, Wo)
                term = tap * w_ref[kh * 3 + kw, j]                # bcast (Cin, 1, 1)
                acc = term if acc is None else acc + term
        y_ref[j, :, 0] = acc
        # per-channel partial statistics for BN1 (global reduce finished in wrapper)
        s_ref[0, j] = jnp.sum(jnp.sum(acc, axis=2, keepdims=True),
                              axis=1, keepdims=True)
        sq = acc * acc
        ss_ref[0, j] = jnp.sum(jnp.sum(sq, axis=2, keepdims=True),
                               axis=1, keepdims=True)


# --------------- pass 2: BN1 + GELU + 1x1 pointwise (+ BN2 partial stats) ---------------
def _pw_kernel(y1_ref, wp_ref, g_ref, b_ref, mu_ref, rs_ref, y2_ref, s_ref, ss_ref):
    # (C, TM) tiles, channels on sublanes, M on lanes (lane-dense stores)
    z = (y1_ref[...] - mu_ref[...]) * rs_ref[...] * g_ref[...] + b_ref[...]
    z = _gelu(z)
    # pointwise conv = (C, C) @ (C, TM) channel matmul with lane-dense output
    y2 = jnp.dot(wp_ref[...], z, preferred_element_type=jnp.float32)
    y2_ref[...] = y2
    s_ref[0] = jnp.sum(y2, axis=1, keepdims=True)
    ss_ref[0] = jnp.sum(y2 * y2, axis=1, keepdims=True)


# ----------------------------- pass 3: BN2 + GELU -----------------------------
def _bn_act_kernel(y_ref, g_ref, b_ref, mu_ref, rs_ref, o_ref):
    z = (y_ref[...] - mu_ref[...]) * rs_ref[...] * g_ref[...] + b_ref[...]
    o_ref[...] = _gelu(z).astype(o_ref.dtype)


def _pick_tile_m(m, max_tm=2048):
    """Largest multiple of 128 that divides m (<= max_tm); fall back to full M."""
    best = None
    t = 128
    while t <= min(m, max_tm):
        if m % t == 0:
            best = t
        t += 128
    return best if best is not None else m


def dsconv_f2(x_nchw, w_dw, w_pw, gamma, beta, *, eps=1e-5):
    """Pallas implementation of DSConv_f2.forward (training-mode BN).

    x_nchw: (N, Cin, H, W)     f32
    w_dw:   (Cout, 1, 3, 3)    grouped (groups=Cin) conv weight, bias=False
    w_pw:   (Cout, Cout, 1, 1) pointwise conv weight, bias=False
    gamma, beta: (Cout,)       BN affine params (shared by both BN applications)
    returns (N, Cout, H//2, W//2)
    """
    N, Cin, H, W = x_nchw.shape
    Cout = w_dw.shape[0]
    assert Cout % Cin == 0, "groups=in_channel requires out_channel % in_channel == 0"
    mult = Cout // Cin
    # TODO(synk): odd H/W (ragged stride-2 tail) is not handled by the parity-split path.
    assert H % 2 == 0 and W % 2 == 0, "even spatial dims expected (k=3, s=2, p=1)"
    Ho, Wo = H // 2, W // 2
    M = N * Ho * Wo
    Hpo, Wpo = Ho + 1, Wo + 1

    cparams = pltpu.CompilerParams(dimension_semantics=("parallel",),
                                   vmem_limit_bytes=_VMEM_LIMIT)

    # ---- layout plumbing: one reorganization pass over the input, no duplication ----
    x = x_nchw.astype(jnp.float32)
    xp = jnp.pad(x, ((0, 0), (0, 0), (1, 1), (1, 1)))          # padding=(1, 1)
    # parity split: plane (a, b) = padded rows a::2, cols b::2.  Every one of the 9
    # depthwise taps is then a unit-stride (Ho, Wo) window of one of the 4 planes.
    xpar = jnp.stack([xp[:, :, a::2, b::2] for a in range(2) for b in range(2)],
                     axis=1)                                   # (N, 4, Cin, Ho+1, Wo+1)

    # depthwise weights regrouped to [tap, j, ci]; output channel co = ci*mult + j
    wdw = w_dw[:, 0, :, :].astype(jnp.float32).reshape(Cin, mult, 3, 3)
    w_taps = jnp.transpose(wdw, (2, 3, 1, 0)).reshape(9, mult, Cin, 1, 1)

    y1_gp, s1p, ss1p = pl.pallas_call(
        functools.partial(_dw_kernel, mult=mult, ho=Ho, wo=Wo),
        grid=(N,),
        out_shape=(
            jax.ShapeDtypeStruct((mult, Cin, N, Ho, Wo), jnp.float32),
            jax.ShapeDtypeStruct((N, mult, Cin, 1, 1), jnp.float32),
            jax.ShapeDtypeStruct((N, mult, Cin, 1, 1), jnp.float32),
        ),
        in_specs=[
            pl.BlockSpec((1, 4, Cin, Hpo, Wpo), lambda n: (n, 0, 0, 0, 0)),
            pl.BlockSpec((9, mult, Cin, 1, 1), lambda n: (0, 0, 0, 0, 0)),
        ],
        out_specs=(
            pl.BlockSpec((mult, Cin, 1, Ho, Wo), lambda n: (0, 0, n, 0, 0)),
            pl.BlockSpec((1, mult, Cin, 1, 1), lambda n: (n, 0, 0, 0, 0)),
            pl.BlockSpec((1, mult, Cin, 1, 1), lambda n: (n, 0, 0, 0, 0)),
        ),
        compiler_params=cparams,
    )(xpar, w_taps)

    # (mult, Cin, N, Ho, Wo) -> (C, M): free contiguous reshape.  Channel order is the
    # "grouped" permutation c' = j*Cin + ci  <->  original channel co = ci*mult + j;
    # the permutation is absorbed into gamma/beta of BN1 and the pointwise weight.
    y1 = y1_gp.reshape(Cout, M)
    perm = np.arange(Cout).reshape(Cin, mult).transpose(1, 0).reshape(-1)

    gamma_f = gamma.astype(jnp.float32)
    beta_f = beta.astype(jnp.float32)
    gamma1 = gamma_f[perm].reshape(Cout, 1)
    beta1 = beta_f[perm].reshape(Cout, 1)
    gamma2 = gamma_f.reshape(Cout, 1)
    beta2 = beta_f.reshape(Cout, 1)
    wp = w_pw[:, :, 0, 0].astype(jnp.float32)[:, perm]   # consumes permuted z1 rows,
                                                         # emits original channel order
    # global BN1 batch statistics (biased variance, training-mode BatchNorm2d)
    s1 = jnp.sum(s1p, axis=0).reshape(Cout, 1)
    ss1 = jnp.sum(ss1p, axis=0).reshape(Cout, 1)
    mean1 = s1 / M
    rstd1 = jax.lax.rsqrt(ss1 / M - mean1 * mean1 + eps)

    TM = _pick_tile_m(M)
    nm = M // TM
    tile = pl.BlockSpec((Cout, TM), lambda i: (0, i))
    col = pl.BlockSpec((Cout, 1), lambda i: (0, 0))

    y2, s2p, ss2p = pl.pallas_call(
        _pw_kernel,
        grid=(nm,),
        out_shape=(
            jax.ShapeDtypeStruct((Cout, M), jnp.float32),
            jax.ShapeDtypeStruct((nm, Cout, 1), jnp.float32),
            jax.ShapeDtypeStruct((nm, Cout, 1), jnp.float32),
        ),
        in_specs=[tile,
                  pl.BlockSpec((Cout, Cout), lambda i: (0, 0)),
                  col, col, col, col],
        out_specs=(tile,
                   pl.BlockSpec((1, Cout, 1), lambda i: (i, 0, 0)),
                   pl.BlockSpec((1, Cout, 1), lambda i: (i, 0, 0))),
        compiler_params=cparams,
    )(y1, wp, gamma1, beta1, mean1, rstd1)

    mean2 = jnp.sum(s2p, axis=0) / M                      # (Cout, 1)
    rstd2 = jax.lax.rsqrt(jnp.sum(ss2p, axis=0) / M - mean2 * mean2 + eps)

    out_cm = pl.pallas_call(
        _bn_act_kernel,
        grid=(nm,),
        out_shape=jax.ShapeDtypeStruct((Cout, M), jnp.float32),
        in_specs=[tile, col, col, col, col],
        out_specs=tile,
        compiler_params=cparams,
    )(y2, gamma2, beta2, mean2, rstd2)

    # back to NCHW (single output transpose; input stayed in its native NCHW layout)
    return out_cm.reshape(Cout, N, Ho, Wo).transpose(1, 0, 2, 3)


def dsconv_f2_ref(x_nchw, w_dw, w_pw, gamma, beta, eps=1e-5):
    """Pure-JAX reference (same training-mode semantics) for correctness checking."""
    def bn_gelu(y):
        mean = jnp.mean(y, axis=(0, 2, 3), keepdims=True)
        var = jnp.mean((y - mean) ** 2, axis=(0, 2, 3), keepdims=True)
        yn = (y - mean) / jnp.sqrt(var + eps)
        yn = yn * gamma.reshape(1, -1, 1, 1) + beta.reshape(1, -1, 1, 1)
        return jax.nn.gelu(yn, approximate=False)

    y1 = jax.lax.conv_general_dilated(
        x_nchw, w_dw, window_strides=(2, 2), padding=((1, 1), (1, 1)),
        dimension_numbers=("NCHW", "OIHW", "NCHW"),
        feature_group_count=x_nchw.shape[1])
    z1 = bn_gelu(y1)
    y2 = jax.lax.conv_general_dilated(
        z1, w_pw, window_strides=(1, 1), padding="VALID",
        dimension_numbers=("NCHW", "OIHW", "NCHW"))
    return bn_gelu(y2)


if __name__ == "__main__":
    key = jax.random.PRNGKey(0)
    k1, k2, k3 = jax.random.split(key, 3)

    N, Cin, H, W = 2, 4, 16, 16
    Cout = 8  # groups=Cin=4 with depth multiplier 2 (Cout % Cin == 0, as nn.Conv2d requires)

    x = jax.random.normal(k1, (N, Cin, H, W), jnp.float32)
    w_dw = jax.random.normal(k2, (Cout, 1, 3, 3), jnp.float32) * 0.2
    w_pw = jax.random.normal(k3, (Cout, Cout, 1, 1), jnp.float32) * 0.2
    gamma = jnp.ones((Cout,), jnp.float32)   # BatchNorm2d default init (weight=1)
    beta = jnp.zeros((Cout,), jnp.float32)   # BatchNorm2d default init (bias=0)

    out = jax.block_until_ready(dsconv_f2(x, w_dw, w_pw, gamma, beta))
    ref = jax.block_until_ready(dsconv_f2_ref(x, w_dw, w_pw, gamma, beta))

    assert out.shape == (N, Cout, H // 2, W // 2), out.shape
    assert bool(jnp.allclose(out, ref, atol=2e-3, rtol=2e-3)), "mismatch vs reference"
    print("KERNEL_OK")
</pallas_src>

<mosaic_0001>
module attributes {stable_mosaic.version = 11 : i64} {
  func.func @_dw_kernel(%arg0: i32, %arg1: memref<1x4x4x9x9xf32, #tpu.memory_space<vmem>>, %arg2: memref<9x2x4x1x1xf32, #tpu.memory_space<vmem>>, %arg3: memref<2x4x1x8x8xf32, #tpu.memory_space<vmem>>, %arg4: memref<1x2x4x1x1xf32, #tpu.memory_space<vmem>>, %arg5: memref<1x2x4x1x1xf32, #tpu.memory_space<vmem>>) attributes {dimension_semantics = [#tpu.dimension_semantics<parallel>], iteration_bounds = array<i64: 2>, scalar_prefetch = 0 : i64, scratch_operands = 0 : i64, tpu.core_type = #tpu.core_type<tc>, window_params = [{transform_indices = @transform_0, window_bounds = array<i64: 1, 4, 4, 9, 9>}, {pipeline_mode = #tpu.pipeline_mode<synchronous>, transform_indices = @transform_1, window_bounds = array<i64: 9, 2, 4, 1, 1>}, {transform_indices = @transform_2, window_bounds = array<i64: 2, 4, 1, 8, 8>}, {transform_indices = @transform_3, window_bounds = array<i64: 1, 2, 4, 1, 1>}, {transform_indices = @transform_4, window_bounds = array<i64: 1, 2, 4, 1, 1>}]} {
    %c0 = arith.constant 0 : index
    %c0_0 = arith.constant 0 : index
    %c0_1 = arith.constant 0 : index
    %c0_2 = arith.constant 0 : index
    %c0_3 = arith.constant 0 : index
    %0 = vector.load %arg1[%c0, %c0_0, %c0_1, %c0_2, %c0_3] : memref<1x4x4x9x9xf32, #tpu.memory_space<vmem>>, vector<1x1x4x8x8xf32>
    %1 = vector.shape_cast %0 : vector<1x1x4x8x8xf32> to vector<4x8x8xf32>
    %c0_4 = arith.constant 0 : index
    %c0_5 = arith.constant 0 : index
    %c0_6 = arith.constant 0 : index
    %c0_7 = arith.constant 0 : index
    %c0_8 = arith.constant 0 : index
    %2 = vector.load %arg2[%c0_4, %c0_5, %c0_6, %c0_7, %c0_8] : memref<9x2x4x1x1xf32, #tpu.memory_space<vmem>>, vector<1x1x4x1x1xf32>
    %3 = vector.shape_cast %2 : vector<1x1x4x1x1xf32> to vector<4x1x1xf32>
    %4 = vector.broadcast %3 : vector<4x1x1xf32> to vector<4x8x8xf32>
    %5 = arith.mulf %1, %4 : vector<4x8x8xf32>
    %c0_9 = arith.constant 0 : index
    %c1 = arith.constant 1 : index
    %c0_10 = arith.constant 0 : index
    %c0_11 = arith.constant 0 : index
    %c0_12 = arith.constant 0 : index
    %6 = vector.load %arg1[%c0_9, %c1, %c0_10, %c0_11, %c0_12] : memref<1x4x4x9x9xf32, #tpu.memory_space<vmem>>, vector<1x1x4x8x8xf32>
    %7 = vector.shape_cast %6 : vector<1x1x4x8x8xf32> to vector<4x8x8xf32>
    %c1_13 = arith.constant 1 : index
    %c0_14 = arith.constant 0 : index
    %c0_15 = arith.constant 0 : index
    %c0_16 = arith.constant 0 : index
    %c0_17 = arith.constant 0 : index
    %8 = vector.load %arg2[%c1_13, %c0_14, %c0_15, %c0_16, %c0_17] : memref<9x2x4x1x1xf32, #tpu.memory_space<vmem>>, vector<1x1x4x1x1xf32>
    %9 = vector.shape_cast %8 : vector<1x1x4x1x1xf32> to vector<4x1x1xf32>
    %10 = vector.broadcast %9 : vector<4x1x1xf32> to vector<4x8x8xf32>
    %11 = arith.mulf %7, %10 : vector<4x8x8xf32>
    %12 = arith.addf %5, %11 : vector<4x8x8xf32>
    %c0_18 = arith.constant 0 : index
    %c0_19 = arith.constant 0 : index
    %c0_20 = arith.constant 0 : index
    %c0_21 = arith.constant 0 : index
    %c1_22 = arith.constant 1 : index
    %13 = vector.load %arg1[%c0_18, %c0_19, %c0_20, %c0_21, %c1_22] : memref<1x4x4x9x9xf32, #tpu.memory_space<vmem>>, vector<1x1x4x8x8xf32>
    %14 = vector.shape_cast %13 : vector<1x1x4x8x8xf32> to vector<4x8x8xf32>
    %c2 = arith.constant 2 : index
    %c0_23 = arith.constant 0 : index
    %c0_24 = arith.constant 0 : index
    %c0_25 = arith.constant 0 : index
    %c0_26 = arith.constant 0 : index
    %15 = vector.load %arg2[%c2, %c0_23, %c0_24, %c0_25, %c0_26] : memref<9x2x4x1x1xf32, #tpu.memory_space<vmem>>, vector<1x1x4x1x1xf32>
    %16 = vector.shape_cast %15 : vector<1x1x4x1x1xf32> to vector<4x1x1xf32>
    %17 = vector.broadcast %16 : vector<4x1x1xf32> to vector<4x8x8xf32>
    %18 = arith.mulf %14, %17 : vector<4x8x8xf32>
    %19 = arith.addf %12, %18 : vector<4x8x8xf32>
    %c0_27 = arith.constant 0 : index
    %c2_28 = arith.constant 2 : index
    %c0_29 = arith.constant 0 : index
    %c0_30 = arith.constant 0 : index
    %c0_31 = arith.constant 0 : index
    %20 = vector.load %arg1[%c0_27, %c2_28, %c0_29, %c0_30, %c0_31] : memref<1x4x4x9x9xf32, #tpu.memory_space<vmem>>, vector<1x1x4x8x8xf32>
    %21 = vector.shape_cast %20 : vector<1x1x4x8x8xf32> to vector<4x8x8xf32>
    %c3 = arith.constant 3 : index
    %c0_32 = arith.constant 0 : index
    %c0_33 = arith.constant 0 : index
    %c0_34 = arith.constant 0 : index
    %c0_35 = arith.constant 0 : index
    %22 = vector.load %arg2[%c3, %c0_32, %c0_33, %c0_34, %c0_35] : memref<9x2x4x1x1xf32, #tpu.memory_space<vmem>>, vector<1x1x4x1x1xf32>
    %23 = vector.shape_cast %22 : vector<1x1x4x1x1xf32> to vector<4x1x1xf32>
    %24 = vector.broadcast %23 : vector<4x1x1xf32> to vector<4x8x8xf32>
    %25 = arith.mulf %21, %24 : vector<4x8x8xf32>
    %26 = arith.addf %19, %25 : vector<4x8x8xf32>
    %c0_36 = arith.constant 0 : index
    %c3_37 = arith.constant 3 : index
    %c0_38 = arith.constant 0 : index
    %c0_39 = arith.constant 0 : index
    %c0_40 = arith.constant 0 : index
    %27 = vector.load %arg1[%c0_36, %c3_37, %c0_38, %c0_39, %c0_40] : memref<1x4x4x9x9xf32, #tpu.memory_space<vmem>>, vector<1x1x4x8x8xf32>
    %28 = vector.shape_cast %27 : vector<1x1x4x8x8xf32> to vector<4x8x8xf32>
    %c4 = arith.constant 4 : index
    %c0_41 = arith.constant 0 : index
    %c0_42 = arith.constant 0 : index
    %c0_43 = arith.constant 0 : index
    %c0_44 = arith.constant 0 : index
    %29 = vector.load %arg2[%c4, %c0_41, %c0_42, %c0_43, %c0_44] : memref<9x2x4x1x1xf32, #tpu.memory_space<vmem>>, vector<1x1x4x1x1xf32>
    %30 = vector.shape_cast %29 : vector<1x1x4x1x1xf32> to vector<4x1x1xf32>
    %31 = vector.broadcast %30 : vector<4x1x1xf32> to vector<4x8x8xf32>
    %32 = arith.mulf %28, %31 : vector<4x8x8xf32>
    %33 = arith.addf %26, %32 : vector<4x8x8xf32>
    %c0_45 = arith.constant 0 : index
    %c2_46 = arith.constant 2 : index
    %c0_47 = arith.constant 0 : index
    %c0_48 = arith.constant 0 : index
    %c1_49 = arith.constant 1 : index
    %34 = vector.load %arg1[%c0_45, %c2_46, %c0_47, %c0_48, %c1_49] : memref<1x4x4x9x9xf32, #tpu.memory_space<vmem>>, vector<1x1x4x8x8xf32>
    %35 = vector.shape_cast %34 : vector<1x1x4x8x8xf32> to vector<4x8x8xf32>
    %c5 = arith.constant 5 : index
    %c0_50 = arith.constant 0 : index
    %c0_51 = arith.constant 0 : index
    %c0_52 = arith.constant 0 : index
    %c0_53 = arith.constant 0 : index
    %36 = vector.load %arg2[%c5, %c0_50, %c0_51, %c0_52, %c0_53] : memref<9x2x4x1x1xf32, #tpu.memory_space<vmem>>, vector<1x1x4x1x1xf32>
    %37 = vector.shape_cast %36 : vector<1x1x4x1x1xf32> to vector<4x1x1xf32>
    %38 = vector.broadcast %37 : vector<4x1x1xf32> to vector<4x8x8xf32>
    %39 = arith.mulf %35, %38 : vector<4x8x8xf32>
    %40 = arith.addf %33, %39 : vector<4x8x8xf32>
    %c0_54 = arith.constant 0 : index
    %c0_55 = arith.constant 0 : index
    %c0_56 = arith.constant 0 : index
    %c1_57 = arith.constant 1 : index
    %c0_58 = arith.constant 0 : index
    %41 = vector.load %arg1[%c0_54, %c0_55, %c0_56, %c1_57, %c0_58] : memref<1x4x4x9x9xf32, #tpu.memory_space<vmem>>, vector<1x1x4x8x8xf32>
    %42 = vector.shape_cast %41 : vector<1x1x4x8x8xf32> to vector<4x8x8xf32>
    %c6 = arith.constant 6 : index
    %c0_59 = arith.constant 0 : index
    %c0_60 = arith.constant 0 : index
    %c0_61 = arith.constant 0 : index
    %c0_62 = arith.constant 0 : index
    %43 = vector.load %arg2[%c6, %c0_59, %c0_60, %c0_61, %c0_62] : memref<9x2x4x1x1xf32, #tpu.memory_space<vmem>>, vector<1x1x4x1x1xf32>
    %44 = vector.shape_cast %43 : vector<1x1x4x1x1xf32> to vector<4x1x1xf32>
    %45 = vector.broadcast %44 : vector<4x1x1xf32> to vector<4x8x8xf32>
    %46 = arith.mulf %42, %45 : vector<4x8x8xf32>
    %47 = arith.addf %40, %46 : vector<4x8x8xf32>
    %c0_63 = arith.constant 0 : index
    %c1_64 = arith.constant 1 : index
    %c0_65 = arith.constant 0 : index
    %c1_66 = arith.constant 1 : index
    %c0_67 = arith.constant 0 : index
    %48 = vector.load %arg1[%c0_63, %c1_64, %c0_65, %c1_66, %c0_67] : memref<1x4x4x9x9xf32, #tpu.memory_space<vmem>>, vector<1x1x4x8x8xf32>
    %49 = vector.shape_cast %48 : vector<1x1x4x8x8xf32> to vector<4x8x8xf32>
    %c7 = arith.constant 7 : index
    %c0_68 = arith.constant 0 : index
    %c0_69 = arith.constant 0 : index
    %c0_70 = arith.constant 0 : index
    %c0_71 = arith.constant 0 : index
    %50 = vector.load %arg2[%c7, %c0_68, %c0_69, %c0_70, %c0_71] : memref<9x2x4x1x1xf32, #tpu.memory_space<vmem>>, vector<1x1x4x1x1xf32>
    %51 = vector.shape_cast %50 : vector<1x1x4x1x1xf32> to vector<4x1x1xf32>
    %52 = vector.broadcast %51 : vector<4x1x1xf32> to vector<4x8x8xf32>
    %53 = arith.mulf %49, %52 : vector<4x8x8xf32>
    %54 = arith.addf %47, %53 : vector<4x8x8xf32>
    %c0_72 = arith.constant 0 : index
    %c0_73 = arith.constant 0 : index
    %c0_74 = arith.constant 0 : index
    %c1_75 = arith.constant 1 : index
    %c1_76 = arith.constant 1 : index
    %55 = vector.load %arg1[%c0_72, %c0_73, %c0_74, %c1_75, %c1_76] : memref<1x4x4x9x9xf32, #tpu.memory_space<vmem>>, vector<1x1x4x8x8xf32>
    %56 = vector.shape_cast %55 : vector<1x1x4x8x8xf32> to vector<4x8x8xf32>
    %c8 = arith.constant 8 : index
    %c0_77 = arith.constant 0 : index
    %c0_78 = arith.constant 0 : index
    %c0_79 = arith.constant 0 : index
    %c0_80 = arith.constant 0 : index
    %57 = vector.load %arg2[%c8, %c0_77, %c0_78, %c0_79, %c0_80] : memref<9x2x4x1x1xf32, #tpu.memory_space<vmem>>, vector<1x1x4x1x1xf32>
    %58 = vector.shape_cast %57 : vector<1x1x4x1x1xf32> to vector<4x1x1xf32>
    %59 = vector.broadcast %58 : vector<4x1x1xf32> to vector<4x8x8xf32>
    %60 = arith.mulf %56, %59 : vector<4x8x8xf32>
    %61 = arith.addf %54, %60 : vector<4x8x8xf32>
    %c0_81 = arith.constant 0 : index
    %c0_82 = arith.constant 0 : index
    %c0_83 = arith.constant 0 : index
    %c0_84 = arith.constant 0 : index
    %c0_85 = arith.constant 0 : index
    %62 = vector.load %arg3[%c0_81, %c0_82, %c0_83, %c0_84, %c0_85] : memref<2x4x1x8x8xf32, #tpu.memory_space<vmem>>, vector<1x4x1x8x8xf32>
    %63 = vector.shape_cast %62 : vector<1x4x1x8x8xf32> to vector<4x8x8xf32>
    %64 = vector.shape_cast %61 : vector<4x8x8xf32> to vector<1x4x1x8x8xf32>
    tpu.vector_store %arg3[%c0_81, %c0_82, %c0_83, %c0_84, %c0_85], %64 {strides = array<i32>} : memref<2x4x1x8x8xf32, #tpu.memory_space<vmem>>, vector<1x4x1x8x8xf32>,
    %cst = arith.constant dense<0.000000e+00> : vector<4x8xf32>
    %65 = vector.multi_reduction <add>, %61, %cst [2] : vector<4x8x8xf32> to vector<4x8xf32>
    %66 = vector.shape_cast %65 : vector<4x8xf32> to vector<4x8x1xf32>
    %cst_86 = arith.constant dense<0.000000e+00> : vector<4x1xf32>
    %67 = vector.multi_reduction <add>, %66, %cst_86 [1] : vector<4x8x1xf32> to vector<4x1xf32>
    %68 = vector.shape_cast %67 : vector<4x1xf32> to vector<4x1x1xf32>
    %c0_87 = arith.constant 0 : index
    %c0_88 = arith.constant 0 : index
    %c0_89 = arith.constant 0 : index
    %c0_90 = arith.constant 0 : index
    %c0_91 = arith.constant 0 : index
    %69 = vector.load %arg4[%c0_87, %c0_88, %c0_89, %c0_90, %c0_91] : memref<1x2x4x1x1xf32, #tpu.memory_space<vmem>>, vector<1x1x4x1x1xf32>
    %70 = vector.shape_cast %69 : vector<1x1x4x1x1xf32> to vector<4x1x1xf32>
    %71 = vector.shape_cast %68 : vector<4x1x1xf32> to vector<1x1x4x1x1xf32>
    tpu.vector_store %arg4[%c0_87, %c0_88, %c0_89, %c0_90, %c0_91], %71 {strides = array<i32>} : memref<1x2x4x1x1xf32, #tpu.memory_space<vmem>>, vector<1x1x4x1x1xf32>,
    %72 = arith.mulf %61, %61 : vector<4x8x8xf32>
    %cst_92 = arith.constant dense<0.000000e+00> : vector<4x8xf32>
    %73 = vector.multi_reduction <add>, %72, %cst_92 [2] : vector<4x8x8xf32> to vector<4x8xf32>
    %74 = vector.shape_cast %73 : vector<4x8xf32> to vector<4x8x1xf32>
    %cst_93 = arith.constant dense<0.000000e+00> : vector<4x1xf32>
    %75 = vector.multi_reduction <add>, %74, %cst_93 [1] : vector<4x8x1xf32> to vector<4x1xf32>
    %76 = vector.shape_cast %75 : vector<4x1xf32> to vector<4x1x1xf32>
    %c0_94 = arith.constant 0 : index
    %c0_95 = arith.constant 0 : index
    %c0_96 = arith.constant 0 : index
    %c0_97 = arith.constant 0 : index
    %c0_98 = arith.constant 0 : index
    %77 = vector.load %arg5[%c0_94, %c0_95, %c0_96, %c0_97, %c0_98] : memref<1x2x4x1x1xf32, #tpu.memory_space<vmem>>, vector<1x1x4x1x1xf32>
    %78 = vector.shape_cast %77 : vector<1x1x4x1x1xf32> to vector<4x1x1xf32>
    %79 = vector.shape_cast %76 : vector<4x1x1xf32> to vector<1x1x4x1x1xf32>
    tpu.vector_store %arg5[%c0_94, %c0_95, %c0_96, %c0_97, %c0_98], %79 {strides = array<i32>} : memref<1x2x4x1x1xf32, #tpu.memory_space<vmem>>, vector<1x1x4x1x1xf32>,
    %c0_99 = arith.constant 0 : index
    %c0_100 = arith.constant 0 : index
    %c0_101 = arith.constant 0 : index
    %c0_102 = arith.constant 0 : index
    %c0_103 = arith.constant 0 : index
    %80 = vector.load %arg1[%c0_99, %c0_100, %c0_101, %c0_102, %c0_103] : memref<1x4x4x9x9xf32, #tpu.memory_space<vmem>>, vector<1x1x4x8x8xf32>
    %81 = vector.shape_cast %80 : vector<1x1x4x8x8xf32> to vector<4x8x8xf32>
    %c0_104 = arith.constant 0 : index
    %c1_105 = arith.constant 1 : index
    %c0_106 = arith.constant 0 : index
    %c0_107 = arith.constant 0 : index
    %c0_108 = arith.constant 0 : index
    %82 = vector.load %arg2[%c0_104, %c1_105, %c0_106, %c0_107, %c0_108] : memref<9x2x4x1x1xf32, #tpu.memory_space<vmem>>, vector<1x1x4x1x1xf32>
    %83 = vector.shape_cast %82 : vector<1x1x4x1x1xf32> to vector<4x1x1xf32>
    %84 = vector.broadcast %83 : vector<4x1x1xf32> to vector<4x8x8xf32>
    %85 = arith.mulf %81, %84 : vector<4x8x8xf32>
    %c0_109 = arith.constant 0 : index
    %c1_110 = arith.constant 1 : index
    %c0_111 = arith.constant 0 : index
    %c0_112 = arith.constant 0 : index
    %c0_113 = arith.constant 0 : index
    %86 = vector.load %arg1[%c0_109, %c1_110, %c0_111, %c0_112, %c0_113] : memref<1x4x4x9x9xf32, #tpu.memory_space<vmem>>, vector<1x1x4x8x8xf32>
    %87 = vector.shape_cast %86 : vector<1x1x4x8x8xf32> to vector<4x8x8xf32>
    %c1_114 = arith.constant 1 : index
    %c1_115 = arith.constant 1 : index
    %c0_116 = arith.constant 0 : index
    %c0_117 = arith.constant 0 : index
    %c0_118 = arith.constant 0 : index
    %88 = vector.load %arg2[%c1_114, %c1_115, %c0_116, %c0_117, %c0_118] : memref<9x2x4x1x1xf32, #tpu.memory_space<vmem>>, vector<1x1x4x1x1xf32>
    %89 = vector.shape_cast %88 : vector<1x1x4x1x1xf32> to vector<4x1x1xf32>
    %90 = vector.broadcast %89 : vector<4x1x1xf32> to vector<4x8x8xf32>
    %91 = arith.mulf %87, %90 : vector<4x8x8xf32>
    %92 = arith.addf %85, %91 : vector<4x8x8xf32>
    %c0_119 = arith.constant 0 : index
    %c0_120 = arith.constant 0 : index
    %c0_121 = arith.constant 0 : index
    %c0_122 = arith.constant 0 : index
    %c1_123 = arith.constant 1 : index
    %93 = vector.load %arg1[%c0_119, %c0_120, %c0_121, %c0_122, %c1_123] : memref<1x4x4x9x9xf32, #tpu.memory_space<vmem>>, vector<1x1x4x8x8xf32>
    %94 = vector.shape_cast %93 : vector<1x1x4x8x8xf32> to vector<4x8x8xf32>
    %c2_124 = arith.constant 2 : index
    %c1_125 = arith.constant 1 : index
    %c0_126 = arith.constant 0 : index
    %c0_127 = arith.constant 0 : index
    %c0_128 = arith.constant 0 : index
    %95 = vector.load %arg2[%c2_124, %c1_125, %c0_126, %c0_127, %c0_128] : memref<9x2x4x1x1xf32, #tpu.memory_space<vmem>>, vector<1x1x4x1x1xf32>
    %96 = vector.shape_cast %95 : vector<1x1x4x1x1xf32> to vector<4x1x1xf32>
    %97 = vector.broadcast %96 : vector<4x1x1xf32> to vector<4x8x8xf32>
    %98 = arith.mulf %94, %97 : vector<4x8x8xf32>
    %99 = arith.addf %92, %98 : vector<4x8x8xf32>
    %c0_129 = arith.constant 0 : index
    %c2_130 = arith.constant 2 : index
    %c0_131 = arith.constant 0 : index
    %c0_132 = arith.constant 0 : index
    %c0_133 = arith.constant 0 : index
    %100 = vector.load %arg1[%c0_129, %c2_130, %c0_131, %c0_132, %c0_133] : memref<1x4x4x9x9xf32, #tpu.memory_space<vmem>>, vector<1x1x4x8x8xf32>
    %101 = vector.shape_cast %100 : vector<1x1x4x8x8xf32> to vector<4x8x8xf32>
    %c3_134 = arith.constant 3 : index
    %c1_135 = arith.constant 1 : index
    %c0_136 = arith.constant 0 : index
    %c0_137 = arith.constant 0 : index
    %c0_138 = arith.constant 0 : index
    %102 = vector.load %arg2[%c3_134, %c1_135, %c0_136, %c0_137, %c0_138] : memref<9x2x4x1x1xf32, #tpu.memory_space<vmem>>, vector<1x1x4x1x1xf32>
    %103 = vector.shape_cast %102 : vector<1x1x4x1x1xf32> to vector<4x1x1xf32>
    %104 = vector.broadcast %103 : vector<4x1x1xf32> to vector<4x8x8xf32>
    %105 = arith.mulf %101, %104 : vector<4x8x8xf32>
    %106 = arith.addf %99, %105 : vector<4x8x8xf32>
    %c0_139 = arith.constant 0 : index
    %c3_140 = arith.constant 3 : index
    %c0_141 = arith.constant 0 : index
    %c0_142 = arith.constant 0 : index
    %c0_143 = arith.constant 0 : index
    %107 = vector.load %arg1[%c0_139, %c3_140, %c0_141, %c0_142, %c0_143] : memref<1x4x4x9x9xf32, #tpu.memory_space<vmem>>, vector<1x1x4x8x8xf32>
    %108 = vector.shape_cast %107 : vector<1x1x4x8x8xf32> to vector<4x8x8xf32>
    %c4_144 = arith.constant 4 : index
    %c1_145 = arith.constant 1 : index
    %c0_146 = arith.constant 0 : index
    %c0_147 = arith.constant 0 : index
    %c0_148 = arith.constant 0 : index
    %109 = vector.load %arg2[%c4_144, %c1_145, %c0_146, %c0_147, %c0_148] : memref<9x2x4x1x1xf32, #tpu.memory_space<vmem>>, vector<1x1x4x1x1xf32>
    %110 = vector.shape_cast %109 : vector<1x1x4x1x1xf32> to vector<4x1x1xf32>
    %111 = vector.broadcast %110 : vector<4x1x1xf32> to vector<4x8x8xf32>
    %112 = arith.mulf %108, %111 : vector<4x8x8xf32>
    %113 = arith.addf %106, %112 : vector<4x8x8xf32>
    %c0_149 = arith.constant 0 : index
    %c2_150 = arith.constant 2 : index
    %c0_151 = arith.constant 0 : index
    %c0_152 = arith.constant 0 : index
    %c1_153 = arith.constant 1 : index
    %114 = vector.load %arg1[%c0_149, %c2_150, %c0_151, %c0_152, %c1_153] : memref<1x4x4x9x9xf32, #tpu.memory_space<vmem>>, vector<1x1x4x8x8xf32>
    %115 = vector.shape_cast %114 : vector<1x1x4x8x8xf32> to vector<4x8x8xf32>
    %c5_154 = arith.constant 5 : index
    %c1_155 = arith.constant 1 : index
    %c0_156 = arith.constant 0 : index
    %c0_157 = arith.constant 0 : index
    %c0_158 = arith.constant 0 : index
    %116 = vector.load %arg2[%c5_154, %c1_155, %c0_156, %c0_157, %c0_158] : memref<9x2x4x1x1xf32, #tpu.memory_space<vmem>>, vector<1x1x4x1x1xf32>
    %117 = vector.shape_cast %116 : vector<1x1x4x1x1xf32> to vector<4x1x1xf32>
    %118 = vector.broadcast %117 : vector<4x1x1xf32> to vector<4x8x8xf32>
    %119 = arith.mulf %115, %118 : vector<4x8x8xf32>
    %120 = arith.addf %113, %119 : vector<4x8x8xf32>
    %c0_159 = arith.constant 0 : index
    %c0_160 = arith.constant 0 : index
    %c0_161 = arith.constant 0 : index
    %c1_162 = arith.constant 1 : index
    %c0_163 = arith.constant 0 : index
    %121 = vector.load %arg1[%c0_159, %c0_160, %c0_161, %c1_162, %c0_163] : memref<1x4x4x9x9xf32, #tpu.memory_space<vmem>>, vector<1x1x4x8x8xf32>
    %122 = vector.shape_cast %121 : vector<1x1x4x8x8xf32> to vector<4x8x8xf32>
    %c6_164 = arith.constant 6 : index
    %c1_165 = arith.constant 1 : index
    %c0_166 = arith.constant 0 : index
    %c0_167 = arith.constant 0 : index
    %c0_168 = arith.constant 0 : index
    %123 = vector.load %arg2[%c6_164, %c1_165, %c0_166, %c0_167, %c0_168] : memref<9x2x4x1x1xf32, #tpu.memory_space<vmem>>, vector<1x1x4x1x1xf32>
    %124 = vector.shape_cast %123 : vector<1x1x4x1x1xf32> to vector<4x1x1xf32>
    %125 = vector.broadcast %124 : vector<4x1x1xf32> to vector<4x8x8xf32>
    %126 = arith.mulf %122, %125 : vector<4x8x8xf32>
    %127 = arith.addf %120, %126 : vector<4x8x8xf32>
    %c0_169 = arith.constant 0 : index
    %c1_170 = arith.constant 1 : index
    %c0_171 = arith.constant 0 : index
    %c1_172 = arith.constant 1 : index
    %c0_173 = arith.constant 0 : index
    %128 = vector.load %arg1[%c0_169, %c1_170, %c0_171, %c1_172, %c0_173] : memref<1x4x4x9x9xf32, #tpu.memory_space<vmem>>, vector<1x1x4x8x8xf32>
    %129 = vector.shape_cast %128 : vector<1x1x4x8x8xf32> to vector<4x8x8xf32>
    %c7_174 = arith.constant 7 : index
    %c1_175 = arith.constant 1 : index
    %c0_176 = arith.constant 0 : index
    %c0_177 = arith.constant 0 : index
    %c0_178 = arith.constant 0 : index
    %130 = vector.load %arg2[%c7_174, %c1_175, %c0_176, %c0_177, %c0_178] : memref<9x2x4x1x1xf32, #tpu.memory_space<vmem>>, vector<1x1x4x1x1xf32>
    %131 = vector.shape_cast %130 : vector<1x1x4x1x1xf32> to vector<4x1x1xf32>
    %132 = vector.broadcast %131 : vector<4x1x1xf32> to vector<4x8x8xf32>
    %133 = arith.mulf %129, %132 : vector<4x8x8xf32>
    %134 = arith.addf %127, %133 : vector<4x8x8xf32>
    %c0_179 = arith.constant 0 : index
    %c0_180 = arith.constant 0 : index
    %c0_181 = arith.constant 0 : index
    %c1_182 = arith.constant 1 : index
    %c1_183 = arith.constant 1 : index
    %135 = vector.load %arg1[%c0_179, %c0_180, %c0_181, %c1_182, %c1_183] : memref<1x4x4x9x9xf32, #tpu.memory_space<vmem>>, vector<1x1x4x8x8xf32>
    %136 = vector.shape_cast %135 : vector<1x1x4x8x8xf32> to vector<4x8x8xf32>
    %c8_184 = arith.constant 8 : index
    %c1_185 = arith.constant 1 : index
    %c0_186 = arith.constant 0 : index
    %c0_187 = arith.constant 0 : index
    %c0_188 = arith.constant 0 : index
    %137 = vector.load %arg2[%c8_184, %c1_185, %c0_186, %c0_187, %c0_188] : memref<9x2x4x1x1xf32, #tpu.memory_space<vmem>>, vector<1x1x4x1x1xf32>
    %138 = vector.shape_cast %137 : vector<1x1x4x1x1xf32> to vector<4x1x1xf32>
    %139 = vector.broadcast %138 : vector<4x1x1xf32> to vector<4x8x8xf32>
    %140 = arith.mulf %136, %139 : vector<4x8x8xf32>
    %141 = arith.addf %134, %140 : vector<4x8x8xf32>
    %c1_189 = arith.constant 1 : index
    %c0_190 = arith.constant 0 : index
    %c0_191 = arith.constant 0 : index
    %c0_192 = arith.constant 0 : index
    %c0_193 = arith.constant 0 : index
    %142 = vector.load %arg3[%c1_189, %c0_190, %c0_191, %c0_192, %c0_193] : memref<2x4x1x8x8xf32, #tpu.memory_space<vmem>>, vector<1x4x1x8x8xf32>
    %143 = vector.shape_cast %142 : vector<1x4x1x8x8xf32> to vector<4x8x8xf32>
    %144 = vector.shape_cast %141 : vector<4x8x8xf32> to vector<1x4x1x8x8xf32>
    tpu.vector_store %arg3[%c1_189, %c0_190, %c0_191, %c0_192, %c0_193], %144 {strides = array<i32>} : memref<2x4x1x8x8xf32, #tpu.memory_space<vmem>>, vector<1x4x1x8x8xf32>,
    %cst_194 = arith.constant dense<0.000000e+00> : vector<4x8xf32>
    %145 = vector.multi_reduction <add>, %141, %cst_194 [2] : vector<4x8x8xf32> to vector<4x8xf32>
    %146 = vector.shape_cast %145 : vector<4x8xf32> to vector<4x8x1xf32>
    %cst_195 = arith.constant dense<0.000000e+00> : vector<4x1xf32>
    %147 = vector.multi_reduction <add>, %146, %cst_195 [1] : vector<4x8x1xf32> to vector<4x1xf32>
    %148 = vector.shape_cast %147 : vector<4x1xf32> to vector<4x1x1xf32>
    %c0_196 = arith.constant 0 : index
    %c1_197 = arith.constant 1 : index
    %c0_198 = arith.constant 0 : index
    %c0_199 = arith.constant 0 : index
    %c0_200 = arith.constant 0 : index
    %149 = vector.load %arg4[%c0_196, %c1_197, %c0_198, %c0_199, %c0_200] : memref<1x2x4x1x1xf32, #tpu.memory_space<vmem>>, vector<1x1x4x1x1xf32>
    %150 = vector.shape_cast %149 : vector<1x1x4x1x1xf32> to vector<4x1x1xf32>
    %151 = vector.shape_cast %148 : vector<4x1x1xf32> to vector<1x1x4x1x1xf32>
    tpu.vector_store %arg4[%c0_196, %c1_197, %c0_198, %c0_199, %c0_200], %151 {strides = array<i32>} : memref<1x2x4x1x1xf32, #tpu.memory_space<vmem>>, vector<1x1x4x1x1xf32>,
    %152 = arith.mulf %141, %141 : vector<4x8x8xf32>
    %cst_201 = arith.constant dense<0.000000e+00> : vector<4x8xf32>
    %153 = vector.multi_reduction <add>, %152, %cst_201 [2] : vector<4x8x8xf32> to vector<4x8xf32>
    %154 = vector.shape_cast %153 : vector<4x8xf32> to vector<4x8x1xf32>
    %cst_202 = arith.constant dense<0.000000e+00> : vector<4x1xf32>
    %155 = vector.multi_reduction <add>, %154, %cst_202 [1] : vector<4x8x1xf32> to vector<4x1xf32>
    %156 = vector.shape_cast %155 : vector<4x1xf32> to vector<4x1x1xf32>
    %c0_203 = arith.constant 0 : index
    %c1_204 = arith.constant 1 : index
    %c0_205 = arith.constant 0 : index
    %c0_206 = arith.constant 0 : index
    %c0_207 = arith.constant 0 : index
    %157 = vector.load %arg5[%c0_203, %c1_204, %c0_205, %c0_206, %c0_207] : memref<1x2x4x1x1xf32, #tpu.memory_space<vmem>>, vector<1x1x4x1x1xf32>
    %158 = vector.shape_cast %157 : vector<1x1x4x1x1xf32> to vector<4x1x1xf32>
    %159 = vector.shape_cast %156 : vector<4x1x1xf32> to vector<1x1x4x1x1xf32>
    tpu.vector_store %arg5[%c0_203, %c1_204, %c0_205, %c0_206, %c0_207], %159 {strides = array<i32>} : memref<1x2x4x1x1xf32, #tpu.memory_space<vmem>>, vector<1x1x4x1x1xf32>,
    return
  }
  func.func @transform_0(%arg0: i32) -> (i32, i32, i32, i32, i32) {
    %c0_i32 = arith.constant 0 : i32
    %c0_i32_0 = arith.constant 0 : i32
    %c0_i32_1 = arith.constant 0 : i32
    %c0_i32_2 = arith.constant 0 : i32
    %c0_i32_3 = arith.constant 0 : i32
    return %arg0, %c0_i32, %c0_i32_0, %c0_i32_1, %c0_i32_2 : i32, i32, i32, i32, i32
  }
  func.func @transform_1(%arg0: i32) -> (i32, i32, i32, i32, i32) {
    %c0_i32 = arith.constant 0 : i32
    %c0_i32_0 = arith.constant 0 : i32
    %c0_i32_1 = arith.constant 0 : i32
    %c0_i32_2 = arith.constant 0 : i32
    %c0_i32_3 = arith.constant 0 : i32
    %c0_i32_4 = arith.constant 0 : i32
    return %c0_i32, %c0_i32_0, %c0_i32_1, %c0_i32_2, %c0_i32_3 : i32, i32, i32, i32, i32
  }
  func.func @transform_2(%arg0: i32) -> (i32, i32, i32, i32, i32) {
    %c0_i32 = arith.constant 0 : i32
    %c0_i32_0 = arith.constant 0 : i32
    %c0_i32_1 = arith.constant 0 : i32
    %c0_i32_2 = arith.constant 0 : i32
    %c0_i32_3 = arith.constant 0 : i32
    return %c0_i32, %c0_i32_0, %arg0, %c0_i32_1, %c0_i32_2 : i32, i32, i32, i32, i32
  }
  func.func @transform_3(%arg0: i32) -> (i32, i32, i32, i32, i32) {
    %c0_i32 = arith.constant 0 : i32
    %c0_i32_0 = arith.constant 0 : i32
    %c0_i32_1 = arith.constant 0 : i32
    %c0_i32_2 = arith.constant 0 : i32
    %c0_i32_3 = arith.constant 0 : i32
    return %arg0, %c0_i32, %c0_i32_0, %c0_i32_1, %c0_i32_2 : i32, i32, i32, i32, i32
  }
  func.func @transform_4(%arg0: i32) -> (i32, i32, i32, i32, i32) {
    %c0_i32 = arith.constant 0 : i32
    %c0_i32_0 = arith.constant 0 : i32
    %c0_i32_1 = arith.constant 0 : i32
    %c0_i32_2 = arith.constant 0 : i32
    %c0_i32_3 = arith.constant 0 : i32
    return %arg0, %c0_i32, %c0_i32_0, %c0_i32_1, %c0_i32_2 : i32, i32, i32, i32, i32
  }
}

</mosaic_0001>

<llo_original>
// kernel: tpu_custom_call.1
$region0: #{tpu_custom_call.1}
  #allocation0 [shape = 'u32[]', space=smem, size = 0x4, offset = 0x4, fixed_abs, tag = 'smem constant byte address 0x4 - core index']
  #allocation1 [shape = 'u32[144,128]{1,0:T(1,128)}', space=vmem, size = 0x12000, scoped, tag = 'internal scratch']
  %s0 = inlined_call_operand.vmem [shape: f32[2,4,4,9,9], index: 0, kind: input, shape index: {}]
  %s1 = inlined_call_operand.vmem [shape: f32[9,2,4,1,1], index: 1, kind: input, shape index: {}]
  %s2 = inlined_call_operand.hbm [shape: f32[2,4,2,8,8], index: 2, kind: output, shape index: {0}]
  %s3 = inlined_call_operand.vmem [shape: f32[2,2,4,1,1], index: 3, kind: output, shape index: {1}]
  %s4 = inlined_call_operand.vmem [shape: f32[2,2,4,1,1], index: 4, kind: output, shape index: {2}]
  %5 = xla_tuple %s2, %s3, %s4
  %s6 = sld [smem:[#allocation0]]
  $region57: #{tpu_custom_call.1} parent=0
    _
  %s8 = ssub.s32 1, %s6
  %s9 = scalar_select 0, %s8, %s6
  $region1: #{tpu_custom_call.1} parent=0
    #allocation2 [shape = 'u8[65536]{0}', space=vmem, size = 0x10000, scoped, tag = 'output window, operand 0']
    #allocation3 [shape = 's32[2]{0}', space=sflag, size = 0x8, scoped, tag = 'scoped memory for tpu_custom_call.1']
    %10 = vsyncpa [#allocation3], 0
    %s11 = scalar_lea.sflag [#allocation3], 1
    %12 = vsyncpa %s11, 0
    loop: start=0, step=1, limit=4
    $region2: #{tpu_custom_call.1} parent=1 // loop_pre_header
      _
    $region3: #{tpu_custom_call.1} parent=1 // loop_header
      %s14 = sphi 0, %s18
      %p15 = scmp.ge.s32.totalorder %s14, 4
      %s24 = sphi 0, %s26
      %s27 = sphi 0, %s24
      %s28 = sphi 0, %s27
      %s44 = sphi 0, %s28
      %s48 = sphi 0, %s48
      %s50 = sphi 0, %s48
      %s51 = sphi 0, %s50
      %s65 = sphi 0, %s51
      %s71 = sphi 0, %s73
      %s74 = sphi 0, %s71
      %s75 = sphi 0, %s74
      %s91 = sphi 0, %s75
      %s97 = sphi 0, %s99
      %s100 = sphi 0, %s97
      %s101 = sphi 0, %s100
      %s117 = sphi 0, %s101
      %s123 = sphi 0, %s125
      %s126 = sphi 0, %s123
      %s127 = sphi 0, %s126
      %s143 = sphi 0, %s127
    $region4: #{tpu_custom_call.1} parent=1 // loop_header_branch
      %17 = sbr.rel (%p15) target = $region8
    $region5: #{tpu_custom_call.1} parent=1 // loop_body
      %s19 = ssub.s32 %s14, 1
      %s20 = ssub.s32 %s14, 2
      %s21 = sadd.s32 %s14, 1
      %s22 = ssub.s32 %s14, %s21
      %p23 = scmp.eq.s32.totalorder %s22, 0
      %s25 = sadd.s32 %s24, 1
      %s26 = scalar_select %p23, %s24, %s25
      %p29 = pneg %p23
      %p30 = scmp.eq.s32.totalorder %s14, 1
      %p31 = por %p29, %p30
      %p32 = scmp.ne.s32.totalorder %s24, %s27
      %p33 = scmp.eq.s32.totalorder %s14, 0
      %p34 = por %p32, %p33
      %p35 = scmp.ne.s32.totalorder %s24, %s27
      %p36 = scmp.eq.s32.totalorder %s19, 1
      %p37 = por %p35, %p36
      %p38 = scmp.ne.s32.totalorder %s27, %s28
      %p39 = scmp.eq.s32.totalorder %s19, 0
      %p40 = por %p38, %p39
      %p41 = scmp.ne.s32.totalorder %s27, %s28
      %p42 = scmp.eq.s32.totalorder %s20, 1
      %p43 = por %p41, %p42
      %p45 = scmp.ne.s32.totalorder %s28, %s44
      %p46 = scmp.eq.s32.totalorder %s20, 0
      %p47 = por %p45, %p46
      %s49 = sadd.s32 %s48, 1
      %p52 = scmp.eq.s32.totalorder %s14, 1
      %p53 = scmp.ne.s32.totalorder %s48, %s50
      %p54 = scmp.eq.s32.totalorder %s14, 0
      %p55 = por %p53, %p54
      %p56 = scmp.ne.s32.totalorder %s48, %s50
      %p57 = scmp.eq.s32.totalorder %s19, 1
      %p58 = por %p56, %p57
      %p59 = scmp.ne.s32.totalorder %s50, %s51
      %p60 = scmp.eq.s32.totalorder %s19, 0
      %p61 = por %p59, %p60
      %p62 = scmp.ne.s32.totalorder %s50, %s51
      %p63 = scmp.eq.s32.totalorder %s20, 1
      %p64 = por %p62, %p63
      %p66 = scmp.ne.s32.totalorder %s51, %s65
      %p67 = scmp.eq.s32.totalorder %s20, 0
      %p68 = por %p66, %p67
      %s69 = ssub.s32 %s14, %s21
      %p70 = scmp.eq.s32.totalorder %s69, 0
      %s72 = sadd.s32 %s71, 1
      %s73 = scalar_select %p70, %s71, %s72
      %p76 = pneg %p70
      %p77 = scmp.eq.s32.totalorder %s14, 1
      %p78 = por %p76, %p77
      %p79 = scmp.ne.s32.totalorder %s71, %s74
      %p80 = scmp.eq.s32.totalorder %s14, 0
      %p81 = por %p79, %p80
      %p82 = scmp.ne.s32.totalorder %s71, %s74
      %p83 = scmp.eq.s32.totalorder %s19, 1
      %p84 = por %p82, %p83
      %p85 = scmp.ne.s32.totalorder %s74, %s75
      %p86 = scmp.eq.s32.totalorder %s19, 0
      %p87 = por %p85, %p86
      %p88 = scmp.ne.s32.totalorder %s74, %s75
      %p89 = scmp.eq.s32.totalorder %s20, 1
      %p90 = por %p88, %p89
      %p92 = scmp.ne.s32.totalorder %s75, %s91
      %p93 = scmp.eq.s32.totalorder %s20, 0
      %p94 = por %p92, %p93
      %s95 = ssub.s32 %s14, %s21
      %p96 = scmp.eq.s32.totalorder %s95, 0
      %s98 = sadd.s32 %s97, 1
      %s99 = scalar_select %p96, %s97, %s98
      %p102 = pneg %p96
      %p103 = scmp.eq.s32.totalorder %s14, 1
      %p104 = por %p102, %p103
      %p105 = scmp.ne.s32.totalorder %s97, %s100
      %p106 = scmp.eq.s32.totalorder %s14, 0
      %p107 = por %p105, %p106
      %p108 = scmp.ne.s32.totalorder %s97, %s100
      %p109 = scmp.eq.s32.totalorder %s19, 1
      %p110 = por %p108, %p109
      %p111 = scmp.ne.s32.totalorder %s100, %s101
      %p112 = scmp.eq.s32.totalorder %s19, 0
      %p113 = por %p111, %p112
      %p114 = scmp.ne.s32.totalorder %s100, %s101
      %p115 = scmp.eq.s32.totalorder %s20, 1
      %p116 = por %p114, %p115
      %p118 = scmp.ne.s32.totalorder %s101, %s117
      %p119 = scmp.eq.s32.totalorder %s20, 0
      %p120 = por %p118, %p119
      %s121 = ssub.s32 %s14, %s21
      %p122 = scmp.eq.s32.totalorder %s121, 0
      %s124 = sadd.s32 %s123, 1
      %s125 = scalar_select %p122, %s123, %s124
      %p128 = pneg %p122
      %p129 = scmp.eq.s32.totalorder %s14, 1
      %p130 = por %p128, %p129
      %p131 = scmp.ne.s32.totalorder %s123, %s126
      %p132 = scmp.eq.s32.totalorder %s14, 0
      %p133 = por %p131, %p132
      %p134 = scmp.ne.s32.totalorder %s123, %s126
      %p135 = scmp.eq.s32.totalorder %s19, 1
      %p136 = por %p134, %p135
      %p137 = scmp.ne.s32.totalorder %s126, %s127
      %p138 = scmp.eq.s32.totalorder %s19, 0
      %p139 = por %p137, %p138
      %p140 = scmp.ne.s32.totalorder %s126, %s127
      %p141 = scmp.eq.s32.totalorder %s20, 1
      %p142 = por %p140, %p141
      %p144 = scmp.ne.s32.totalorder %s127, %s143
      %p145 = scmp.eq.s32.totalorder %s20, 0
      %p146 = por %p144, %p145
      %p147 = scmp.le.s32.totalorder 1, %s14
      %p148 = scmp.lt.s32.totalorder %s14, 3
      %p149 = pnand %p147, %p148
      %p150 = pneg %p149
      // Predicated region
      $region9: #{tpu_custom_call.1} parent=5 // pred_check
        _
      $region10: #{tpu_custom_call.1} parent=5 // pred_check_branch
        %152 = sbr.rel (%p149) target = $region12
      $region11: #{tpu_custom_call.1} parent=5 // pred_region
        %s153 = ssub.s32 %s14, 1
        // Predicated region
        $region13: #{tpu_custom_call.1} parent=11 // pred_check
          %p154 = pneg %p61
        $region14: #{tpu_custom_call.1} parent=11 // pred_check_branch
          %156 = sbr.rel (%p154) target = $region16
        $region15: #{tpu_custom_call.1} parent=11 // pred_region
          _
        $region16: #{tpu_custom_call.1} parent=11 // pred_fallthru
          _
      $region12: #{tpu_custom_call.1} parent=5 // pred_fallthru
        _
      %p157 = scmp.lt.s32.totalorder %s14, 2
      // Predicated region
      $region17: #{tpu_custom_call.1} parent=5 // pred_check
        %p158 = pneg %p157
      $region18: #{tpu_custom_call.1} parent=5 // pred_check_branch
        %160 = sbr.rel (%p158) target = $region20
      $region19: #{tpu_custom_call.1} parent=5 // pred_region
        // Predicated region
        $region21: #{tpu_custom_call.1} parent=19 // pred_check
          %p161 = pneg %p34
        $region22: #{tpu_custom_call.1} parent=19 // pred_check_branch
          %163 = sbr.rel (%p161) target = $region24
        $region23: #{tpu_custom_call.1} parent=19 // pred_region
          %p164 = scmp.lt.s32.totalorder %s14, 1
          %s165 = scalar_select %p164, %s14, 1
          %s166 = smul.addr %s165, 32
          %s167 = smul.addr %s166, 8
          %s168 = scalar_lea.vmem %s0, %s167
        $region24: #{tpu_custom_call.1} parent=19 // pred_fallthru
          _
      $region20: #{tpu_custom_call.1} parent=5 // pred_fallthru
        _
      %p169 = scmp.le.s32.totalorder 1, %s14
      %p170 = scmp.lt.s32.totalorder %s14, 3
      %p171 = pnand %p169, %p170
      %p172 = pneg %p171
      // Predicated region
      $region25: #{tpu_custom_call.1} parent=5 // pred_check
        _
      $region26: #{tpu_custom_call.1} parent=5 // pred_check_branch
        %174 = sbr.rel (%p171) target = $region28
      $region27: #{tpu_custom_call.1} parent=5 // pred_region
        %s175 = ssub.s32 %s14, 1
        %p176 = scmp.lt.s32.totalorder %s19, 1
        %s177 = scalar_select %p176, %s19, 1
        %s178 = smul.addr %s177, 32
        %s179 = smul.addr %s178, 8
        %s180 = scalar_lea.vmem %s0, %s179
        %p181 = pneg %p40
        %p182 = pneg %p37
        %p183 = pneg %p61
        %p184 = pneg %p58
        %p185 = pneg %p87
        %p186 = pneg %p84
        %s187 = sand.u32 %s74, 1
        %s188 = scalar_lea.sflag [#allocation3], %s187
        %s189 = sand.u32 %s74, 1
        %s190 = smul.addr %s189, 64
        %s191 = scalar_lea.vmem [#allocation2], %s190
        %p192 = pneg %p113
        %p193 = pneg %p110
        %p194 = scmp.lt.s32.totalorder %s19, 1
        %s195 = scalar_select %p194, %s19, 1
        %s196 = smul.addr %s195, 8
        %s197 = scalar_lea.vmem %s3, %s196
        %p198 = pneg %p139
        %p199 = pneg %p136
        %p200 = scmp.lt.s32.totalorder %s19, 1
        %s201 = scalar_select %p200, %s19, 1
        %s202 = smul.addr %s201, 8
        %s203 = scalar_lea.vmem %s4, %s202
        %p204 = scmp.lt.s32.totalorder %s19, 1
        %s205 = scalar_select %p204, %s19, 1
        %s206 = smul.addr %s205, 32
        %s207 = smul.addr %s206, 8
        %s208 = scalar_lea.vmem %s0, %s207
        %p209 = scmp.lt.s32.totalorder %s19, 1
        %s210 = scalar_select %p209, %s19, 1
        %s211 = smul.addr %s210, 8
        %s212 = scalar_lea.vmem %s3, %s211
        %p213 = scmp.lt.s32.totalorder %s19, 1
        %s214 = scalar_select %p213, %s19, 1
        %s215 = smul.addr %s214, 8
        %s216 = scalar_lea.vmem %s4, %s215
        %v217 = vld [vmem:[%s208] sm:$0xff]
        %v218 = vld [vmem:[%s208 + $0x10] sm:$0xff]
        %v219 = vld [vmem:[%s208 + $0x20] sm:$0xff]
        %v220 = vld [vmem:[%s208 + $0x30] sm:$0xff]
        %v221 = vld [vmem:[%s1] sm:$0x1]
        %v222 = vld [vmem:[%s1 + $0x1] sm:$0x1]
        %v223 = vld [vmem:[%s1 + $0x2] sm:$0x1]
        %v224 = vld [vmem:[%s1 + $0x3] sm:$0x1]
        %v229 = vlaneseq
        %v230 = vshrl.u32 %v229, 7
        %v231 = vsub.s32 0, %v230
        %v232 = vrot.slane %v221, %v231
        %v233 = vlaneseq
        %v234 = vshrl.u32 %v233, 7
        %v235 = vsub.s32 0, %v234
        %v236 = vrot.slane %v222, %v235
        %v237 = vlaneseq
        %v238 = vshrl.u32 %v237, 7
        %v239 = vsub.s32 0, %v238
        %v240 = vrot.slane %v223, %v239
        %v241 = vlaneseq
        %v242 = vshrl.u32 %v241, 7
        %v243 = vsub.s32 0, %v242
        %v244 = vrot.slane %v224, %v243
        %245 = vset.pattern.permute.xlu0 0
        %246 = vperm.xlu0 %245, %v232
        %v247 = vpop.permute.xlu0 %246
        %249 = vset.pattern.permute.xlu0 0
        %250 = vperm.xlu0 %249, %v236
        %v251 = vpop.permute.xlu0 %250
        %253 = vset.pattern.permute.xlu0 0
        %254 = vperm.xlu0 %253, %v240
        %v255 = vpop.permute.xlu0 %254
        %257 = vset.pattern.permute.xlu0 0
        %258 = vperm.xlu0 %257, %v244
        %v259 = vpop.permute.xlu0 %258
        %v261 = vmul.f32 %v217, %v247
        %v262 = vmul.f32 %v218, %v251
        %v263 = vmul.f32 %v219, %v255
        %v264 = vmul.f32 %v220, %v259
        %s265 = scalar_lea.vmem %s208, 64
        %v266 = vld [vmem:[%s265] sm:$0xff]
        %v267 = vld [vmem:[%s265 + $0x10] sm:$0xff]
        %v268 = vld [vmem:[%s265 + $0x20] sm:$0xff]
        %v269 = vld [vmem:[%s265 + $0x30] sm:$0xff]
        %s270 = scalar_lea.vmem %s1, 8
        %v271 = vld [vmem:[%s270] sm:$0x1]
        %v272 = vld [vmem:[%s270 + $0x1] sm:$0x1]
        %v273 = vld [vmem:[%s270 + $0x2] sm:$0x1]
        %v274 = vld [vmem:[%s270 + $0x3] sm:$0x1]
        %v279 = vlaneseq
        %v280 = vshrl.u32 %v279, 7
        %v281 = vsub.s32 0, %v280
        %v282 = vrot.slane %v271, %v281
        %v283 = vlaneseq
        %v284 = vshrl.u32 %v283, 7
        %v285 = vsub.s32 0, %v284
        %v286 = vrot.slane %v272, %v285
        %v287 = vlaneseq
        %v288 = vshrl.u32 %v287, 7
        %v289 = vsub.s32 0, %v288
        %v290 = vrot.slane %v273, %v289
        %v291 = vlaneseq
        %v292 = vshrl.u32 %v291, 7
        %v293 = vsub.s32 0, %v292
        %v294 = vrot.slane %v274, %v293
        %295 = vset.pattern.permute.xlu0 0
        %296 = vperm.xlu0 %295, %v282
        %v297 = vpop.permute.xlu0 %296
        %299 = vset.pattern.permute.xlu0 0
        %300 = vperm.xlu0 %299, %v286
        %v301 = vpop.permute.xlu0 %300
        %303 = vset.pattern.permute.xlu0 0
        %304 = vperm.xlu0 %303, %v290
        %v305 = vpop.permute.xlu0 %304
        %307 = vset.pattern.permute.xlu0 0
        %308 = vperm.xlu0 %307, %v294
        %v309 = vpop.permute.xlu0 %308
        %v311 = vmul.f32 %v266, %v297
        %v312 = vmul.f32 %v267, %v301
        %v313 = vmul.f32 %v268, %v305
        %v314 = vmul.f32 %v269, %v309
        %v315 = vadd.f32 %v261, %v311
        %v316 = vadd.f32 %v262, %v312
        %v317 = vadd.f32 %v263, %v313
        %v318 = vadd.f32 %v264, %v314
        %s319 = scalar_lea.vmem %s1, 16
        %v320 = vld [vmem:[%s319] sm:$0x1]
        %v321 = vld [vmem:[%s319 + $0x1] sm:$0x1]
        %v322 = vld [vmem:[%s319 + $0x2] sm:$0x1]
        %v323 = vld [vmem:[%s319 + $0x3] sm:$0x1]
        %v328 = vlaneseq
        %v329 = vshrl.u32 %v328, 7
        %v330 = vsub.s32 0, %v329
        %v331 = vrot.slane %v320, %v330
        %v332 = vlaneseq
        %v333 = vshrl.u32 %v332, 7
        %v334 = vsub.s32 0, %v333
        %v335 = vrot.slane %v321, %v334
        %v336 = vlaneseq
        %v337 = vshrl.u32 %v336, 7
        %v338 = vsub.s32 0, %v337
        %v339 = vrot.slane %v322, %v338
        %v340 = vlaneseq
        %v341 = vshrl.u32 %v340, 7
        %v342 = vsub.s32 0, %v341
        %v343 = vrot.slane %v323, %v342
        %344 = vset.pattern.permute.xlu0 0
        %345 = vperm.xlu0 %344, %v331
        %v346 = vpop.permute.xlu0 %345
        %348 = vset.pattern.permute.xlu0 0
        %349 = vperm.xlu0 %348, %v335
        %v350 = vpop.permute.xlu0 %349
        %352 = vset.pattern.permute.xlu0 0
        %353 = vperm.xlu0 %352, %v339
        %v354 = vpop.permute.xlu0 %353
        %356 = vset.pattern.permute.xlu0 0
        %357 = vperm.xlu0 %356, %v343
        %v358 = vpop.permute.xlu0 %357
        %v360 = vmul.f32 %v217, %v346
        %v361 = vmul.f32 %v218, %v350
        %v362 = vmul.f32 %v219, %v354
        %v363 = vmul.f32 %v220, %v358
        %368 = vrot.lane.b32.xlu0 %v360, 127
        %v369 = vpop.permute.xlu0 %368
        %370 = vrot.lane.b32.xlu0 %v361, 127
        %v371 = vpop.permute.xlu0 %370
        %372 = vrot.lane.b32.xlu0 %v362, 127
        %v373 = vpop.permute.xlu0 %372
        %374 = vrot.lane.b32.xlu0 %v363, 127
        %v375 = vpop.permute.xlu0 %374
        %v380 = vadd.f32 %v315, %v369
        %v381 = vadd.f32 %v316, %v371
        %v382 = vadd.f32 %v317, %v373
        %v383 = vadd.f32 %v318, %v375
        %s384 = scalar_lea.vmem %s208, 128
        %v385 = vld [vmem:[%s384] sm:$0xff]
        %v386 = vld [vmem:[%s384 + $0x10] sm:$0xff]
        %v387 = vld [vmem:[%s384 + $0x20] sm:$0xff]
        %v388 = vld [vmem:[%s384 + $0x30] sm:$0xff]
        %s389 = scalar_lea.vmem %s1, 24
        %v390 = vld [vmem:[%s389] sm:$0x1]
        %v391 = vld [vmem:[%s389 + $0x1] sm:$0x1]
        %v392 = vld [vmem:[%s389 + $0x2] sm:$0x1]
        %v393 = vld [vmem:[%s389 + $0x3] sm:$0x1]
        %v398 = vlaneseq
        %v399 = vshrl.u32 %v398, 7
        %v400 = vsub.s32 0, %v399
        %v401 = vrot.slane %v390, %v400
        %v402 = vlaneseq
        %v403 = vshrl.u32 %v402, 7
        %v404 = vsub.s32 0, %v403
        %v405 = vrot.slane %v391, %v404
        %v406 = vlaneseq
        %v407 = vshrl.u32 %v406, 7
        %v408 = vsub.s32 0, %v407
        %v409 = vrot.slane %v392, %v408
        %v410 = vlaneseq
        %v411 = vshrl.u32 %v410, 7
        %v412 = vsub.s32 0, %v411
        %v413 = vrot.slane %v393, %v412
        %414 = vset.pattern.permute.xlu0 0
        %415 = vperm.xlu0 %414, %v401
        %v416 = vpop.permute.xlu0 %415
        %418 = vset.pattern.permute.xlu0 0
        %419 = vperm.xlu0 %418, %v405
        %v420 = vpop.permute.xlu0 %419
        %422 = vset.pattern.permute.xlu0 0
        %423 = vperm.xlu0 %422, %v409
        %v424 = vpop.permute.xlu0 %423
        %426 = vset.pattern.permute.xlu0 0
        %427 = vperm.xlu0 %426, %v413
        %v428 = vpop.permute.xlu0 %427
        %v430 = vmul.f32 %v385, %v416
        %v431 = vmul.f32 %v386, %v420
        %v432 = vmul.f32 %v387, %v424
        %v433 = vmul.f32 %v388, %v428
        %v434 = vadd.f32 %v380, %v430
        %v435 = vadd.f32 %v381, %v431
        %v436 = vadd.f32 %v382, %v432
        %v437 = vadd.f32 %v383, %v433
        %s438 = scalar_lea.vmem %s208, 192
        %v439 = vld [vmem:[%s438] sm:$0xff]
        %v440 = vld [vmem:[%s438 + $0x10] sm:$0xff]
        %v441 = vld [vmem:[%s438 + $0x20] sm:$0xff]
        %v442 = vld [vmem:[%s438 + $0x30] sm:$0xff]
        %s443 = scalar_lea.vmem %s1, 32
        %v444 = vld [vmem:[%s443] sm:$0x1]
        %v445 = vld [vmem:[%s443 + $0x1] sm:$0x1]
        %v446 = vld [vmem:[%s443 + $0x2] sm:$0x1]
        %v447 = vld [vmem:[%s443 + $0x3] sm:$0x1]
        %v452 = vlaneseq
        %v453 = vshrl.u32 %v452, 7
        %v454 = vsub.s32 0, %v453
        %v455 = vrot.slane %v444, %v454
        %v456 = vlaneseq
        %v457 = vshrl.u32 %v456, 7
        %v458 = vsub.s32 0, %v457
        %v459 = vrot.slane %v445, %v458
        %v460 = vlaneseq
        %v461 = vshrl.u32 %v460, 7
        %v462 = vsub.s32 0, %v461
        %v463 = vrot.slane %v446, %v462
        %v464 = vlaneseq
        %v465 = vshrl.u32 %v464, 7
        %v466 = vsub.s32 0, %v465
        %v467 = vrot.slane %v447, %v466
        %468 = vset.pattern.permute.xlu0 0
        %469 = vperm.xlu0 %468, %v455
        %v470 = vpop.permute.xlu0 %469
        %472 = vset.pattern.permute.xlu0 0
        %473 = vperm.xlu0 %472, %v459
        %v474 = vpop.permute.xlu0 %473
        %476 = vset.pattern.permute.xlu0 0
        %477 = vperm.xlu0 %476, %v463
        %v478 = vpop.permute.xlu0 %477
        %480 = vset.pattern.permute.xlu0 0
        %481 = vperm.xlu0 %480, %v467
        %v482 = vpop.permute.xlu0 %481
        %v484 = vmul.f32 %v439, %v470
        %v485 = vmul.f32 %v440, %v474
        %v486 = vmul.f32 %v441, %v478
        %v487 = vmul.f32 %v442, %v482
        %v488 = vadd.f32 %v434, %v484
        %v489 = vadd.f32 %v435, %v485
        %v490 = vadd.f32 %v436, %v486
        %v491 = vadd.f32 %v437, %v487
        %s492 = scalar_lea.vmem %s1, 40
        %v493 = vld [vmem:[%s492] sm:$0x1]
        %v494 = vld [vmem:[%s492 + $0x1] sm:$0x1]
        %v495 = vld [vmem:[%s492 + $0x2] sm:$0x1]
        %v496 = vld [vmem:[%s492 + $0x3] sm:$0x1]
        %v501 = vlaneseq
        %v502 = vshrl.u32 %v501, 7
        %v503 = vsub.s32 0, %v502
        %v504 = vrot.slane %v493, %v503
        %v505 = vlaneseq
        %v506 = vshrl.u32 %v505, 7
        %v507 = vsub.s32 0, %v506
        %v508 = vrot.slane %v494, %v507
        %v509 = vlaneseq
        %v510 = vshrl.u32 %v509, 7
        %v511 = vsub.s32 0, %v510
        %v512 = vrot.slane %v495, %v511
        %v513 = vlaneseq
        %v514 = vshrl.u32 %v513, 7
        %v515 = vsub.s32 0, %v514
        %v516 = vrot.slane %v496, %v515
        %517 = vset.pattern.permute.xlu0 0
        %518 = vperm.xlu0 %517, %v504
        %v519 = vpop.permute.xlu0 %518
        %521 = vset.pattern.permute.xlu0 0
        %522 = vperm.xlu0 %521, %v508
        %v523 = vpop.permute.xlu0 %522
        %525 = vset.pattern.permute.xlu0 0
        %526 = vperm.xlu0 %525, %v512
        %v527 = vpop.permute.xlu0 %526
        %529 = vset.pattern.permute.xlu0 0
        %530 = vperm.xlu0 %529, %v516
        %v531 = vpop.permute.xlu0 %530
        %v533 = vmul.f32 %v385, %v519
        %v534 = vmul.f32 %v386, %v523
        %v535 = vmul.f32 %v387, %v527
        %v536 = vmul.f32 %v388, %v531
        %541 = vrot.lane.b32.xlu0 %v533, 127
        %v542 = vpop.permute.xlu0 %541
        %543 = vrot.lane.b32.xlu0 %v534, 127
        %v544 = vpop.permute.xlu0 %543
        %545 = vrot.lane.b32.xlu0 %v535, 127
        %v546 = vpop.permute.xlu0 %545
        %547 = vrot.lane.b32.xlu0 %v536, 127
        %v548 = vpop.permute.xlu0 %547
        %v553 = vadd.f32 %v488, %v542
        %v554 = vadd.f32 %v489, %v544
        %v555 = vadd.f32 %v490, %v546
        %v556 = vadd.f32 %v491, %v548
        %v557 = vld [vmem:[%s208 + $0x1] sm:$0xff]
        %v558 = vld [vmem:[%s208 + $0x11] sm:$0xff]
        %v559 = vld [vmem:[%s208 + $0x21] sm:$0xff]
        %v560 = vld [vmem:[%s208 + $0x31] sm:$0xff]
        %s561 = scalar_lea.vmem %s1, 48
        %v562 = vld [vmem:[%s561] sm:$0x1]
        %v563 = vld [vmem:[%s561 + $0x1] sm:$0x1]
        %v564 = vld [vmem:[%s561 + $0x2] sm:$0x1]
        %v565 = vld [vmem:[%s561 + $0x3] sm:$0x1]
        %v570 = vlaneseq
        %v571 = vshrl.u32 %v570, 7
        %v572 = vsub.s32 0, %v571
        %v573 = vrot.slane %v562, %v572
        %v574 = vlaneseq
        %v575 = vshrl.u32 %v574, 7
        %v576 = vsub.s32 0, %v575
        %v577 = vrot.slane %v563, %v576
        %v578 = vlaneseq
        %v579 = vshrl.u32 %v578, 7
        %v580 = vsub.s32 0, %v579
        %v581 = vrot.slane %v564, %v580
        %v582 = vlaneseq
        %v583 = vshrl.u32 %v582, 7
        %v584 = vsub.s32 0, %v583
        %v585 = vrot.slane %v565, %v584
        %586 = vset.pattern.permute.xlu0 0
        %587 = vperm.xlu0 %586, %v573
        %v588 = vpop.permute.xlu0 %587
        %590 = vset.pattern.permute.xlu0 0
        %591 = vperm.xlu0 %590, %v577
        %v592 = vpop.permute.xlu0 %591
        %594 = vset.pattern.permute.xlu0 0
        %595 = vperm.xlu0 %594, %v581
        %v596 = vpop.permute.xlu0 %595
        %598 = vset.pattern.permute.xlu0 0
        %599 = vperm.xlu0 %598, %v585
        %v600 = vpop.permute.xlu0 %599
        %v602 = vmul.f32 %v557, %v588
        %v603 = vmul.f32 %v558, %v592
        %v604 = vmul.f32 %v559, %v596
        %v605 = vmul.f32 %v560, %v600
        %v606 = vadd.f32 %v553, %v602
        %v607 = vadd.f32 %v554, %v603
        %v608 = vadd.f32 %v555, %v604
        %v609 = vadd.f32 %v556, %v605
        %v610 = vld [vmem:[%s265 + $0x1] sm:$0xff]
        %v611 = vld [vmem:[%s265 + $0x11] sm:$0xff]
        %v612 = vld [vmem:[%s265 + $0x21] sm:$0xff]
        %v613 = vld [vmem:[%s265 + $0x31] sm:$0xff]
        %s614 = scalar_lea.vmem %s1, 56
        %v615 = vld [vmem:[%s614] sm:$0x1]
        %v616 = vld [vmem:[%s614 + $0x1] sm:$0x1]
        %v617 = vld [vmem:[%s614 + $0x2] sm:$0x1]
        %v618 = vld [vmem:[%s614 + $0x3] sm:$0x1]
        %v623 = vlaneseq
        %v624 = vshrl.u32 %v623, 7
        %v625 = vsub.s32 0, %v624
        %v626 = vrot.slane %v615, %v625
        %v627 = vlaneseq
        %v628 = vshrl.u32 %v627, 7
        %v629 = vsub.s32 0, %v628
        %v630 = vrot.slane %v616, %v629
        %v631 = vlaneseq
        %v632 = vshrl.u32 %v631, 7
        %v633 = vsub.s32 0, %v632
        %v634 = vrot.slane %v617, %v633
        %v635 = vlaneseq
        %v636 = vshrl.u32 %v635, 7
        %v637 = vsub.s32 0, %v636
        %v638 = vrot.slane %v618, %v637
        %639 = vset.pattern.permute.xlu0 0
        %640 = vperm.xlu0 %639, %v626
        %v641 = vpop.permute.xlu0 %640
        %643 = vset.pattern.permute.xlu0 0
        %644 = vperm.xlu0 %643, %v630
        %v645 = vpop.permute.xlu0 %644
        %647 = vset.pattern.permute.xlu0 0
        %648 = vperm.xlu0 %647, %v634
        %v649 = vpop.permute.xlu0 %648
        %651 = vset.pattern.permute.xlu0 0
        %652 = vperm.xlu0 %651, %v638
        %v653 = vpop.permute.xlu0 %652
        %v655 = vmul.f32 %v610, %v641
        %v656 = vmul.f32 %v611, %v645
        %v657 = vmul.f32 %v612, %v649
        %v658 = vmul.f32 %v613, %v653
        %v659 = vadd.f32 %v606, %v655
        %v660 = vadd.f32 %v607, %v656
        %v661 = vadd.f32 %v608, %v657
        %v662 = vadd.f32 %v609, %v658
        %s663 = scalar_lea.vmem %s1, 64
        %v664 = vld [vmem:[%s663] sm:$0x1]
        %v665 = vld [vmem:[%s663 + $0x1] sm:$0x1]
        %v666 = vld [vmem:[%s663 + $0x2] sm:$0x1]
        %v667 = vld [vmem:[%s663 + $0x3] sm:$0x1]
        %v672 = vlaneseq
        %v673 = vshrl.u32 %v672, 7
        %v674 = vsub.s32 0, %v673
        %v675 = vrot.slane %v664, %v674
        %v676 = vlaneseq
        %v677 = vshrl.u32 %v676, 7
        %v678 = vsub.s32 0, %v677
        %v679 = vrot.slane %v665, %v678
        %v680 = vlaneseq
        %v681 = vshrl.u32 %v680, 7
        %v682 = vsub.s32 0, %v681
        %v683 = vrot.slane %v666, %v682
        %v684 = vlaneseq
        %v685 = vshrl.u32 %v684, 7
        %v686 = vsub.s32 0, %v685
        %v687 = vrot.slane %v667, %v686
        %688 = vset.pattern.permute.xlu0 0
        %689 = vperm.xlu0 %688, %v675
        %v690 = vpop.permute.xlu0 %689
        %692 = vset.pattern.permute.xlu0 0
        %693 = vperm.xlu0 %692, %v679
        %v694 = vpop.permute.xlu0 %693
        %696 = vset.pattern.permute.xlu0 0
        %697 = vperm.xlu0 %696, %v683
        %v698 = vpop.permute.xlu0 %697
        %700 = vset.pattern.permute.xlu0 0
        %701 = vperm.xlu0 %700, %v687
        %v702 = vpop.permute.xlu0 %701
        %v704 = vmul.f32 %v557, %v690
        %v705 = vmul.f32 %v558, %v694
        %v706 = vmul.f32 %v559, %v698
        %v707 = vmul.f32 %v560, %v702
        %712 = vrot.lane.b32.xlu0 %v704, 127
        %v713 = vpop.permute.xlu0 %712
        %714 = vrot.lane.b32.xlu0 %v705, 127
        %v715 = vpop.permute.xlu0 %714
        %716 = vrot.lane.b32.xlu0 %v706, 127
        %v717 = vpop.permute.xlu0 %716
        %718 = vrot.lane.b32.xlu0 %v707, 127
        %v719 = vpop.permute.xlu0 %718
        %v724 = vadd.f32 %v659, %v713
        %v725 = vadd.f32 %v660, %v715
        %v726 = vadd.f32 %v661, %v717
        %v727 = vadd.f32 %v662, %v719
        %vm728 = vcmask 64512
        %729 = vst.msk [vmem:[%s191] sm:$0xff] %vm728, %v724
        %730 = vst.msk [vmem:[%s191 + $0x8] sm:$0xff] %vm728, %v725
        %731 = vst.msk [vmem:[%s191 + $0x10] sm:$0xff] %vm728, %v726
        %732 = vst.msk [vmem:[%s191 + $0x18] sm:$0xff] %vm728, %v727
        %v733 = vsel %vm728, %v724, 0.0
        %734 = vadd.xlane.f32.xlu0 %v733
        %v735 = vpop.xlane.xlu0 %734
        %v736 = vsel %vm728, %v725, 0.0
        %737 = vadd.xlane.f32.xlu0 %v736
        %v738 = vpop.xlane.xlu0 %737
        %v739 = vsel %vm728, %v726, 0.0
        %740 = vadd.xlane.f32.xlu0 %v739
        %v741 = vpop.xlane.xlu0 %740
        %v742 = vsel %vm728, %v727, 0.0
        %743 = vadd.xlane.f32.xlu0 %v742
        %v744 = vpop.xlane.xlu0 %743
        %v745 = vrot.slane %v735, 4
        %v746 = vadd.f32 %v735, %v745
        %v747 = vrot.slane %v746, 2
        %v748 = vadd.f32 %v746, %v747
        %v749 = vrot.slane %v748, 1
        %v750 = vadd.f32 %v748, %v749
        %v751 = vrot.slane %v738, 4
        %v752 = vadd.f32 %v738, %v751
        %v753 = vrot.slane %v752, 2
        %v754 = vadd.f32 %v752, %v753
        %v755 = vrot.slane %v754, 1
        %v756 = vadd.f32 %v754, %v755
        %v757 = vrot.slane %v741, 4
        %v758 = vadd.f32 %v741, %v757
        %v759 = vrot.slane %v758, 2
        %v760 = vadd.f32 %v758, %v759
        %v761 = vrot.slane %v760, 1
        %v762 = vadd.f32 %v760, %v761
        %v763 = vrot.slane %v744, 4
        %v764 = vadd.f32 %v744, %v763
        %v765 = vrot.slane %v764, 2
        %v766 = vadd.f32 %v764, %v765
        %v767 = vrot.slane %v766, 1
        %v768 = vadd.f32 %v766, %v767
        %vm769 = vcmask 0
        %770 = vst.msk [vmem:[%s212] sm:$0x1] %vm769, %v750
        %771 = vst.msk [vmem:[%s212 + $0x1] sm:$0x1] %vm769, %v756
        %772 = vst.msk [vmem:[%s212 + $0x2] sm:$0x1] %vm769, %v762
        %773 = vst.msk [vmem:[%s212 + $0x3] sm:$0x1] %vm769, %v768
        %v774 = vmul.f32 %v724, %v724
        %v775 = vmul.f32 %v725, %v725
        %v776 = vmul.f32 %v726, %v726
        %v777 = vmul.f32 %v727, %v727
        %v778 = vsel %vm728, %v774, 0.0
        %779 = vadd.xlane.f32.xlu0 %v778
        %v780 = vpop.xlane.xlu0 %779
        %v781 = vsel %vm728, %v775, 0.0
        %782 = vadd.xlane.f32.xlu0 %v781
        %v783 = vpop.xlane.xlu0 %782
        %v784 = vsel %vm728, %v776, 0.0
        %785 = vadd.xlane.f32.xlu0 %v784
        %v786 = vpop.xlane.xlu0 %785
        %v787 = vsel %vm728, %v777, 0.0
        %788 = vadd.xlane.f32.xlu0 %v787
        %v789 = vpop.xlane.xlu0 %788
        %v790 = vrot.slane %v780, 4
        %v791 = vadd.f32 %v780, %v790
        %v792 = vrot.slane %v791, 2
        %v793 = vadd.f32 %v791, %v792
        %v794 = vrot.slane %v793, 1
        %v795 = vadd.f32 %v793, %v794
        %v796 = vrot.slane %v783, 4
        %v797 = vadd.f32 %v783, %v796
        %v798 = vrot.slane %v797, 2
        %v799 = vadd.f32 %v797, %v798
        %v800 = vrot.slane %v799, 1
        %v801 = vadd.f32 %v799, %v800
        %v802 = vrot.slane %v786, 4
        %v803 = vadd.f32 %v786, %v802
        %v804 = vrot.slane %v803, 2
        %v805 = vadd.f32 %v803, %v804
        %v806 = vrot.slane %v805, 1
        %v807 = vadd.f32 %v805, %v806
        %v808 = vrot.slane %v789, 4
        %v809 = vadd.f32 %v789, %v808
        %v810 = vrot.slane %v809, 2
        %v811 = vadd.f32 %v809, %v810
        %v812 = vrot.slane %v811, 1
        %v813 = vadd.f32 %v811, %v812
        %814 = vst.msk [vmem:[%s216] sm:$0x1] %vm769, %v795
        %815 = vst.msk [vmem:[%s216 + $0x1] sm:$0x1] %vm769, %v801
        %816 = vst.msk [vmem:[%s216 + $0x2] sm:$0x1] %vm769, %v807
        %817 = vst.msk [vmem:[%s216 + $0x3] sm:$0x1] %vm769, %v813
        %v818 = vld [vmem:[%s208] sm:$0xff]
        %v819 = vld [vmem:[%s208 + $0x10] sm:$0xff]
        %v820 = vld [vmem:[%s208 + $0x20] sm:$0xff]
        %v821 = vld [vmem:[%s208 + $0x30] sm:$0xff]
        %s822 = scalar_lea.vmem %s1, 4
        %v823 = vld [vmem:[%s822] sm:$0x1]
        %v824 = vld [vmem:[%s822 + $0x1] sm:$0x1]
        %v825 = vld [vmem:[%s822 + $0x2] sm:$0x1]
        %v826 = vld [vmem:[%s822 + $0x3] sm:$0x1]
        %v831 = vlaneseq
        %v832 = vshrl.u32 %v831, 7
        %v833 = vsub.s32 0, %v832
        %v834 = vrot.slane %v823, %v833
        %v835 = vlaneseq
        %v836 = vshrl.u32 %v835, 7
        %v837 = vsub.s32 0, %v836
        %v838 = vrot.slane %v824, %v837
        %v839 = vlaneseq
        %v840 = vshrl.u32 %v839, 7
        %v841 = vsub.s32 0, %v840
        %v842 = vrot.slane %v825, %v841
        %v843 = vlaneseq
        %v844 = vshrl.u32 %v843, 7
        %v845 = vsub.s32 0, %v844
        %v846 = vrot.slane %v826, %v845
        %847 = vset.pattern.permute.xlu0 0
        %848 = vperm.xlu0 %847, %v834
        %v849 = vpop.permute.xlu0 %848
        %851 = vset.pattern.permute.xlu0 0
        %852 = vperm.xlu0 %851, %v838
        %v853 = vpop.permute.xlu0 %852
        %855 = vset.pattern.permute.xlu0 0
        %856 = vperm.xlu0 %855, %v842
        %v857 = vpop.permute.xlu0 %856
        %859 = vset.pattern.permute.xlu0 0
        %860 = vperm.xlu0 %859, %v846
        %v861 = vpop.permute.xlu0 %860
        %v863 = vmul.f32 %v818, %v849
        %v864 = vmul.f32 %v819, %v853
        %v865 = vmul.f32 %v820, %v857
        %v866 = vmul.f32 %v821, %v861
        %v867 = vld [vmem:[%s265] sm:$0xff]
        %v868 = vld [vmem:[%s265 + $0x10] sm:$0xff]
        %v869 = vld [vmem:[%s265 + $0x20] sm:$0xff]
        %v870 = vld [vmem:[%s265 + $0x30] sm:$0xff]
        %s871 = scalar_lea.vmem %s1, 12
        %v872 = vld [vmem:[%s871] sm:$0x1]
        %v873 = vld [vmem:[%s871 + $0x1] sm:$0x1]
        %v874 = vld [vmem:[%s871 + $0x2] sm:$0x1]
        %v875 = vld [vmem:[%s871 + $0x3] sm:$0x1]
        %v880 = vlaneseq
        %v881 = vshrl.u32 %v880, 7
        %v882 = vsub.s32 0, %v881
        %v883 = vrot.slane %v872, %v882
        %v884 = vlaneseq
        %v885 = vshrl.u32 %v884, 7
        %v886 = vsub.s32 0, %v885
        %v887 = vrot.slane %v873, %v886
        %v888 = vlaneseq
        %v889 = vshrl.u32 %v888, 7
        %v890 = vsub.s32 0, %v889
        %v891 = vrot.slane %v874, %v890
        %v892 = vlaneseq
        %v893 = vshrl.u32 %v892, 7
        %v894 = vsub.s32 0, %v893
        %v895 = vrot.slane %v875, %v894
        %896 = vset.pattern.permute.xlu0 0
        %897 = vperm.xlu0 %896, %v883
        %v898 = vpop.permute.xlu0 %897
        %900 = vset.pattern.permute.xlu0 0
        %901 = vperm.xlu0 %900, %v887
        %v902 = vpop.permute.xlu0 %901
        %904 = vset.pattern.permute.xlu0 0
        %905 = vperm.xlu0 %904, %v891
        %v906 = vpop.permute.xlu0 %905
        %908 = vset.pattern.permute.xlu0 0
        %909 = vperm.xlu0 %908, %v895
        %v910 = vpop.permute.xlu0 %909
        %v912 = vmul.f32 %v867, %v898
        %v913 = vmul.f32 %v868, %v902
        %v914 = vmul.f32 %v869, %v906
        %v915 = vmul.f32 %v870, %v910
        %v916 = vadd.f32 %v863, %v912
        %v917 = vadd.f32 %v864, %v913
        %v918 = vadd.f32 %v865, %v914
        %v919 = vadd.f32 %v866, %v915
        %s920 = scalar_lea.vmem %s1, 20
        %v921 = vld [vmem:[%s920] sm:$0x1]
        %v922 = vld [vmem:[%s920 + $0x1] sm:$0x1]
        %v923 = vld [vmem:[%s920 + $0x2] sm:$0x1]
        %v924 = vld [vmem:[%s920 + $0x3] sm:$0x1]
        %v929 = vlaneseq
        %v930 = vshrl.u32 %v929, 7
        %v931 = vsub.s32 0, %v930
        %v932 = vrot.slane %v921, %v931
        %v933 = vlaneseq
        %v934 = vshrl.u32 %v933, 7
        %v935 = vsub.s32 0, %v934
        %v936 = vrot.slane %v922, %v935
        %v937 = vlaneseq
        %v938 = vshrl.u32 %v937, 7
        %v939 = vsub.s32 0, %v938
        %v940 = vrot.slane %v923, %v939
        %v941 = vlaneseq
        %v942 = vshrl.u32 %v941, 7
        %v943 = vsub.s32 0, %v942
        %v944 = vrot.slane %v924, %v943
        %945 = vset.pattern.permute.xlu0 0
        %946 = vperm.xlu0 %945, %v932
        %v947 = vpop.permute.xlu0 %946
        %949 = vset.pattern.permute.xlu0 0
        %950 = vperm.xlu0 %949, %v936
        %v951 = vpop.permute.xlu0 %950
        %953 = vset.pattern.permute.xlu0 0
        %954 = vperm.xlu0 %953, %v940
        %v955 = vpop.permute.xlu0 %954
        %957 = vset.pattern.permute.xlu0 0
        %958 = vperm.xlu0 %957, %v944
        %v959 = vpop.permute.xlu0 %958
        %v961 = vmul.f32 %v818, %v947
        %v962 = vmul.f32 %v819, %v951
        %v963 = vmul.f32 %v820, %v955
        %v964 = vmul.f32 %v821, %v959
        %969 = vrot.lane.b32.xlu0 %v961, 127
        %v970 = vpop.permute.xlu0 %969
        %971 = vrot.lane.b32.xlu0 %v962, 127
        %v972 = vpop.permute.xlu0 %971
        %973 = vrot.lane.b32.xlu0 %v963, 127
        %v974 = vpop.permute.xlu0 %973
        %975 = vrot.lane.b32.xlu0 %v964, 127
        %v976 = vpop.permute.xlu0 %975
        %v981 = vadd.f32 %v916, %v970
        %v982 = vadd.f32 %v917, %v972
        %v983 = vadd.f32 %v918, %v974
        %v984 = vadd.f32 %v919, %v976
        %v985 = vld [vmem:[%s384] sm:$0xff]
        %v986 = vld [vmem:[%s384 + $0x10] sm:$0xff]
        %v987 = vld [vmem:[%s384 + $0x20] sm:$0xff]
        %v988 = vld [vmem:[%s384 + $0x30] sm:$0xff]
        %s989 = scalar_lea.vmem %s1, 28
        %v990 = vld [vmem:[%s989] sm:$0x1]
        %v991 = vld [vmem:[%s989 + $0x1] sm:$0x1]
        %v992 = vld [vmem:[%s989 + $0x2] sm:$0x1]
        %v993 = vld [vmem:[%s989 + $0x3] sm:$0x1]
        %v998 = vlaneseq
        %v999 = vshrl.u32 %v998, 7
        %v1000 = vsub.s32 0, %v999
        %v1001 = vrot.slane %v990, %v1000
        %v1002 = vlaneseq
        %v1003 = vshrl.u32 %v1002, 7
        %v1004 = vsub.s32 0, %v1003
        %v1005 = vrot.slane %v991, %v1004
        %v1006 = vlaneseq
        %v1007 = vshrl.u32 %v1006, 7
        %v1008 = vsub.s32 0, %v1007
        %v1009 = vrot.slane %v992, %v1008
        %v1010 = vlaneseq
        %v1011 = vshrl.u32 %v1010, 7
        %v1012 = vsub.s32 0, %v1011
        %v1013 = vrot.slane %v993, %v1012
        %1014 = vset.pattern.permute.xlu0 0
        %1015 = vperm.xlu0 %1014, %v1001
        %v1016 = vpop.permute.xlu0 %1015
        %1018 = vset.pattern.permute.xlu0 0
        %1019 = vperm.xlu0 %1018, %v1005
        %v1020 = vpop.permute.xlu0 %1019
        %1022 = vset.pattern.permute.xlu0 0
        %1023 = vperm.xlu0 %1022, %v1009
        %v1024 = vpop.permute.xlu0 %1023
        %1026 = vset.pattern.permute.xlu0 0
        %1027 = vperm.xlu0 %1026, %v1013
        %v1028 = vpop.permute.xlu0 %1027
        %v1030 = vmul.f32 %v985, %v1016
        %v1031 = vmul.f32 %v986, %v1020
        %v1032 = vmul.f32 %v987, %v1024
        %v1033 = vmul.f32 %v988, %v1028
        %v1034 = vadd.f32 %v981, %v1030
        %v1035 = vadd.f32 %v982, %v1031
        %v1036 = vadd.f32 %v983, %v1032
        %v1037 = vadd.f32 %v984, %v1033
        %v1038 = vld [vmem:[%s438] sm:$0xff]
        %v1039 = vld [vmem:[%s438 + $0x10] sm:$0xff]
        %v1040 = vld [vmem:[%s438 + $0x20] sm:$0xff]
        %v1041 = vld [vmem:[%s438 + $0x30] sm:$0xff]
        %s1042 = scalar_lea.vmem %s1, 36
        %v1043 = vld [vmem:[%s1042] sm:$0x1]
        %v1044 = vld [vmem:[%s1042 + $0x1] sm:$0x1]
        %v1045 = vld [vmem:[%s1042 + $0x2] sm:$0x1]
        %v1046 = vld [vmem:[%s1042 + $0x3] sm:$0x1]
        %v1051 = vlaneseq
        %v1052 = vshrl.u32 %v1051, 7
        %v1053 = vsub.s32 0, %v1052
        %v1054 = vrot.slane %v1043, %v1053
        %v1055 = vlaneseq
        %v1056 = vshrl.u32 %v1055, 7
        %v1057 = vsub.s32 0, %v1056
        %v1058 = vrot.slane %v1044, %v1057
        %v1059 = vlaneseq
        %v1060 = vshrl.u32 %v1059, 7
        %v1061 = vsub.s32 0, %v1060
        %v1062 = vrot.slane %v1045, %v1061
        %v1063 = vlaneseq
        %v1064 = vshrl.u32 %v1063, 7
        %v1065 = vsub.s32 0, %v1064
        %v1066 = vrot.slane %v1046, %v1065
        %1067 = vset.pattern.permute.xlu0 0
        %1068 = vperm.xlu0 %1067, %v1054
        %v1069 = vpop.permute.xlu0 %1068
        %1071 = vset.pattern.permute.xlu0 0
        %1072 = vperm.xlu0 %1071, %v1058
        %v1073 = vpop.permute.xlu0 %1072
        %1075 = vset.pattern.permute.xlu0 0
        %1076 = vperm.xlu0 %1075, %v1062
        %v1077 = vpop.permute.xlu0 %1076
        %1079 = vset.pattern.permute.xlu0 0
        %1080 = vperm.xlu0 %1079, %v1066
        %v1081 = vpop.permute.xlu0 %1080
        %v1083 = vmul.f32 %v1038, %v1069
        %v1084 = vmul.f32 %v1039, %v1073
        %v1085 = vmul.f32 %v1040, %v1077
        %v1086 = vmul.f32 %v1041, %v1081
        %v1087 = vadd.f32 %v1034, %v1083
        %v1088 = vadd.f32 %v1035, %v1084
        %v1089 = vadd.f32 %v1036, %v1085
        %v1090 = vadd.f32 %v1037, %v1086
        %s1091 = scalar_lea.vmem %s1, 44
        %v1092 = vld [vmem:[%s1091] sm:$0x1]
        %v1093 = vld [vmem:[%s1091 + $0x1] sm:$0x1]
        %v1094 = vld [vmem:[%s1091 + $0x2] sm:$0x1]
        %v1095 = vld [vmem:[%s1091 + $0x3] sm:$0x1]
        %v1100 = vlaneseq
        %v1101 = vshrl.u32 %v1100, 7
        %v1102 = vsub.s32 0, %v1101
        %v1103 = vrot.slane %v1092, %v1102
        %v1104 = vlaneseq
        %v1105 = vshrl.u32 %v1104, 7
        %v1106 = vsub.s32 0, %v1105
        %v1107 = vrot.slane %v1093, %v1106
        %v1108 = vlaneseq
        %v1109 = vshrl.u32 %v1108, 7
        %v1110 = vsub.s32 0, %v1109
        %v1111 = vrot.slane %v1094, %v1110
        %v1112 = vlaneseq
        %v1113 = vshrl.u32 %v1112, 7
        %v1114 = vsub.s32 0, %v1113
        %v1115 = vrot.slane %v1095, %v1114
        %1116 = vset.pattern.permute.xlu0 0
        %1117 = vperm.xlu0 %1116, %v1103
        %v1118 = vpop.permute.xlu0 %1117
        %1120 = vset.pattern.permute.xlu0 0
        %1121 = vperm.xlu0 %1120, %v1107
        %v1122 = vpop.permute.xlu0 %1121
        %1124 = vset.pattern.permute.xlu0 0
        %1125 = vperm.xlu0 %1124, %v1111
        %v1126 = vpop.permute.xlu0 %1125
        %1128 = vset.pattern.permute.xlu0 0
        %1129 = vperm.xlu0 %1128, %v1115
        %v1130 = vpop.permute.xlu0 %1129
        %v1132 = vmul.f32 %v985, %v1118
        %v1133 = vmul.f32 %v986, %v1122
        %v1134 = vmul.f32 %v987, %v1126
        %v1135 = vmul.f32 %v988, %v1130
        %1140 = vrot.lane.b32.xlu0 %v1132, 127
        %v1141 = vpop.permute.xlu0 %1140
        %1142 = vrot.lane.b32.xlu0 %v1133, 127
        %v1143 = vpop.permute.xlu0 %1142
        %1144 = vrot.lane.b32.xlu0 %v1134, 127
        %v1145 = vpop.permute.xlu0 %1144
        %1146 = vrot.lane.b32.xlu0 %v1135, 127
        %v1147 = vpop.permute.xlu0 %1146
        %v1152 = vadd.f32 %v1087, %v1141
        %v1153 = vadd.f32 %v1088, %v1143
        %v1154 = vadd.f32 %v1089, %v1145
        %v1155 = vadd.f32 %v1090, %v1147
        %v1156 = vld [vmem:[%s208 + $0x1] sm:$0xff]
        %v1157 = vld [vmem:[%s208 + $0x11] sm:$0xff]
        %v1158 = vld [vmem:[%s208 + $0x21] sm:$0xff]
        %v1159 = vld [vmem:[%s208 + $0x31] sm:$0xff]
        %s1160 = scalar_lea.vmem %s1, 52
        %v1161 = vld [vmem:[%s1160] sm:$0x1]
        %v1162 = vld [vmem:[%s1160 + $0x1] sm:$0x1]
        %v1163 = vld [vmem:[%s1160 + $0x2] sm:$0x1]
        %v1164 = vld [vmem:[%s1160 + $0x3] sm:$0x1]
        %v1169 = vlaneseq
        %v1170 = vshrl.u32 %v1169, 7
        %v1171 = vsub.s32 0, %v1170
        %v1172 = vrot.slane %v1161, %v1171
        %v1173 = vlaneseq
        %v1174 = vshrl.u32 %v1173, 7
        %v1175 = vsub.s32 0, %v1174
        %v1176 = vrot.slane %v1162, %v1175
        %v1177 = vlaneseq
        %v1178 = vshrl.u32 %v1177, 7
        %v1179 = vsub.s32 0, %v1178
        %v1180 = vrot.slane %v1163, %v1179
        %v1181 = vlaneseq
        %v1182 = vshrl.u32 %v1181, 7
        %v1183 = vsub.s32 0, %v1182
        %v1184 = vrot.slane %v1164, %v1183
        %1185 = vset.pattern.permute.xlu0 0
        %1186 = vperm.xlu0 %1185, %v1172
        %v1187 = vpop.permute.xlu0 %1186
        %1189 = vset.pattern.permute.xlu0 0
        %1190 = vperm.xlu0 %1189, %v1176
        %v1191 = vpop.permute.xlu0 %1190
        %1193 = vset.pattern.permute.xlu0 0
        %1194 = vperm.xlu0 %1193, %v1180
        %v1195 = vpop.permute.xlu0 %1194
        %1197 = vset.pattern.permute.xlu0 0
        %1198 = vperm.xlu0 %1197, %v1184
        %v1199 = vpop.permute.xlu0 %1198
        %v1201 = vmul.f32 %v1156, %v1187
        %v1202 = vmul.f32 %v1157, %v1191
        %v1203 = vmul.f32 %v1158, %v1195
        %v1204 = vmul.f32 %v1159, %v1199
        %v1205 = vadd.f32 %v1152, %v1201
        %v1206 = vadd.f32 %v1153, %v1202
        %v1207 = vadd.f32 %v1154, %v1203
        %v1208 = vadd.f32 %v1155, %v1204
        %v1209 = vld [vmem:[%s265 + $0x1] sm:$0xff]
        %v1210 = vld [vmem:[%s265 + $0x11] sm:$0xff]
        %v1211 = vld [vmem:[%s265 + $0x21] sm:$0xff]
        %v1212 = vld [vmem:[%s265 + $0x31] sm:$0xff]
        %s1213 = scalar_lea.vmem %s1, 60
        %v1214 = vld [vmem:[%s1213] sm:$0x1]
        %v1215 = vld [vmem:[%s1213 + $0x1] sm:$0x1]
        %v1216 = vld [vmem:[%s1213 + $0x2] sm:$0x1]
        %v1217 = vld [vmem:[%s1213 + $0x3] sm:$0x1]
        %v1222 = vlaneseq
        %v1223 = vshrl.u32 %v1222, 7
        %v1224 = vsub.s32 0, %v1223
        %v1225 = vrot.slane %v1214, %v1224
        %v1226 = vlaneseq
        %v1227 = vshrl.u32 %v1226, 7
        %v1228 = vsub.s32 0, %v1227
        %v1229 = vrot.slane %v1215, %v1228
        %v1230 = vlaneseq
        %v1231 = vshrl.u32 %v1230, 7
        %v1232 = vsub.s32 0, %v1231
        %v1233 = vrot.slane %v1216, %v1232
        %v1234 = vlaneseq
        %v1235 = vshrl.u32 %v1234, 7
        %v1236 = vsub.s32 0, %v1235
        %v1237 = vrot.slane %v1217, %v1236
        %1238 = vset.pattern.permute.xlu0 0
        %1239 = vperm.xlu0 %1238, %v1225
        %v1240 = vpop.permute.xlu0 %1239
        %1242 = vset.pattern.permute.xlu0 0
        %1243 = vperm.xlu0 %1242, %v1229
        %v1244 = vpop.permute.xlu0 %1243
        %1246 = vset.pattern.permute.xlu0 0
        %1247 = vperm.xlu0 %1246, %v1233
        %v1248 = vpop.permute.xlu0 %1247
        %1250 = vset.pattern.permute.xlu0 0
        %1251 = vperm.xlu0 %1250, %v1237
        %v1252 = vpop.permute.xlu0 %1251
        %v1254 = vmul.f32 %v1209, %v1240
        %v1255 = vmul.f32 %v1210, %v1244
        %v1256 = vmul.f32 %v1211, %v1248
        %v1257 = vmul.f32 %v1212, %v1252
        %v1258 = vadd.f32 %v1205, %v1254
        %v1259 = vadd.f32 %v1206, %v1255
        %v1260 = vadd.f32 %v1207, %v1256
        %v1261 = vadd.f32 %v1208, %v1257
        %s1262 = scalar_lea.vmem %s1, 68
        %v1263 = vld [vmem:[%s1262] sm:$0x1]
        %v1264 = vld [vmem:[%s1262 + $0x1] sm:$0x1]
        %v1265 = vld [vmem:[%s1262 + $0x2] sm:$0x1]
        %v1266 = vld [vmem:[%s1262 + $0x3] sm:$0x1]
        %v1271 = vlaneseq
        %v1272 = vshrl.u32 %v1271, 7
        %v1273 = vsub.s32 0, %v1272
        %v1274 = vrot.slane %v1263, %v1273
        %v1275 = vlaneseq
        %v1276 = vshrl.u32 %v1275, 7
        %v1277 = vsub.s32 0, %v1276
        %v1278 = vrot.slane %v1264, %v1277
        %v1279 = vlaneseq
        %v1280 = vshrl.u32 %v1279, 7
        %v1281 = vsub.s32 0, %v1280
        %v1282 = vrot.slane %v1265, %v1281
        %v1283 = vlaneseq
        %v1284 = vshrl.u32 %v1283, 7
        %v1285 = vsub.s32 0, %v1284
        %v1286 = vrot.slane %v1266, %v1285
        %1287 = vset.pattern.permute.xlu0 0
        %1288 = vperm.xlu0 %1287, %v1274
        %v1289 = vpop.permute.xlu0 %1288
        %1291 = vset.pattern.permute.xlu0 0
        %1292 = vperm.xlu0 %1291, %v1278
        %v1293 = vpop.permute.xlu0 %1292
        %1295 = vset.pattern.permute.xlu0 0
        %1296 = vperm.xlu0 %1295, %v1282
        %v1297 = vpop.permute.xlu0 %1296
        %1299 = vset.pattern.permute.xlu0 0
        %1300 = vperm.xlu0 %1299, %v1286
        %v1301 = vpop.permute.xlu0 %1300
        %v1303 = vmul.f32 %v1156, %v1289
        %v1304 = vmul.f32 %v1157, %v1293
        %v1305 = vmul.f32 %v1158, %v1297
        %v1306 = vmul.f32 %v1159, %v1301
        %1311 = vrot.lane.b32.xlu0 %v1303, 127
        %v1312 = vpop.permute.xlu0 %1311
        %1313 = vrot.lane.b32.xlu0 %v1304, 127
        %v1314 = vpop.permute.xlu0 %1313
        %1315 = vrot.lane.b32.xlu0 %v1305, 127
        %v1316 = vpop.permute.xlu0 %1315
        %1317 = vrot.lane.b32.xlu0 %v1306, 127
        %v1318 = vpop.permute.xlu0 %1317
        %v1323 = vadd.f32 %v1258, %v1312
        %v1324 = vadd.f32 %v1259, %v1314
        %v1325 = vadd.f32 %v1260, %v1316
        %v1326 = vadd.f32 %v1261, %v1318
        %s1327 = scalar_lea.vmem %s191, 32 [#allocation2]
        %1328 = vst.msk [vmem:[%s1327] sm:$0xff] %vm728, %v1323
        %1329 = vst.msk [vmem:[%s1327 + $0x8] sm:$0xff] %vm728, %v1324
        %1330 = vst.msk [vmem:[%s1327 + $0x10] sm:$0xff] %vm728, %v1325
        %1331 = vst.msk [vmem:[%s1327 + $0x18] sm:$0xff] %vm728, %v1326
        %v1332 = vsel %vm728, %v1323, 0.0
        %1333 = vadd.xlane.f32.xlu0 %v1332
        %v1334 = vpop.xlane.xlu0 %1333
        %v1335 = vsel %vm728, %v1324, 0.0
        %1336 = vadd.xlane.f32.xlu0 %v1335
        %v1337 = vpop.xlane.xlu0 %1336
        %v1338 = vsel %vm728, %v1325, 0.0
        %1339 = vadd.xlane.f32.xlu0 %v1338
        %v1340 = vpop.xlane.xlu0 %1339
        %v1341 = vsel %vm728, %v1326, 0.0
        %1342 = vadd.xlane.f32.xlu0 %v1341
        %v1343 = vpop.xlane.xlu0 %1342
        %v1344 = vrot.slane %v1334, 4
        %v1345 = vadd.f32 %v1334, %v1344
        %v1346 = vrot.slane %v1345, 2
        %v1347 = vadd.f32 %v1345, %v1346
        %v1348 = vrot.slane %v1347, 1
        %v1349 = vadd.f32 %v1347, %v1348
        %v1350 = vrot.slane %v1337, 4
        %v1351 = vadd.f32 %v1337, %v1350
        %v1352 = vrot.slane %v1351, 2
        %v1353 = vadd.f32 %v1351, %v1352
        %v1354 = vrot.slane %v1353, 1
        %v1355 = vadd.f32 %v1353, %v1354
        %v1356 = vrot.slane %v1340, 4
        %v1357 = vadd.f32 %v1340, %v1356
        %v1358 = vrot.slane %v1357, 2
        %v1359 = vadd.f32 %v1357, %v1358
        %v1360 = vrot.slane %v1359, 1
        %v1361 = vadd.f32 %v1359, %v1360
        %v1362 = vrot.slane %v1343, 4
        %v1363 = vadd.f32 %v1343, %v1362
        %v1364 = vrot.slane %v1363, 2
        %v1365 = vadd.f32 %v1363, %v1364
        %v1366 = vrot.slane %v1365, 1
        %v1367 = vadd.f32 %v1365, %v1366
        %s1368 = scalar_lea.vmem %s212, 4
        %1369 = vst.msk [vmem:[%s1368] sm:$0x1] %vm769, %v1349
        %1370 = vst.msk [vmem:[%s1368 + $0x1] sm:$0x1] %vm769, %v1355
        %1371 = vst.msk [vmem:[%s1368 + $0x2] sm:$0x1] %vm769, %v1361
        %1372 = vst.msk [vmem:[%s1368 + $0x3] sm:$0x1] %vm769, %v1367
        %v1373 = vmul.f32 %v1323, %v1323
        %v1374 = vmul.f32 %v1324, %v1324
        %v1375 = vmul.f32 %v1325, %v1325
        %v1376 = vmul.f32 %v1326, %v1326
        %v1377 = vsel %vm728, %v1373, 0.0
        %1378 = vadd.xlane.f32.xlu0 %v1377
        %v1379 = vpop.xlane.xlu0 %1378
        %v1380 = vsel %vm728, %v1374, 0.0
        %1381 = vadd.xlane.f32.xlu0 %v1380
        %v1382 = vpop.xlane.xlu0 %1381
        %v1383 = vsel %vm728, %v1375, 0.0
        %1384 = vadd.xlane.f32.xlu0 %v1383
        %v1385 = vpop.xlane.xlu0 %1384
        %v1386 = vsel %vm728, %v1376, 0.0
        %1387 = vadd.xlane.f32.xlu0 %v1386
        %v1388 = vpop.xlane.xlu0 %1387
        %v1389 = vrot.slane %v1379, 4
        %v1390 = vadd.f32 %v1379, %v1389
        %v1391 = vrot.slane %v1390, 2
        %v1392 = vadd.f32 %v1390, %v1391
        %v1393 = vrot.slane %v1392, 1
        %v1394 = vadd.f32 %v1392, %v1393
        %v1395 = vrot.slane %v1382, 4
        %v1396 = vadd.f32 %v1382, %v1395
        %v1397 = vrot.slane %v1396, 2
        %v1398 = vadd.f32 %v1396, %v1397
        %v1399 = vrot.slane %v1398, 1
        %v1400 = vadd.f32 %v1398, %v1399
        %v1401 = vrot.slane %v1385, 4
        %v1402 = vadd.f32 %v1385, %v1401
        %v1403 = vrot.slane %v1402, 2
        %v1404 = vadd.f32 %v1402, %v1403
        %v1405 = vrot.slane %v1404, 1
        %v1406 = vadd.f32 %v1404, %v1405
        %v1407 = vrot.slane %v1388, 4
        %v1408 = vadd.f32 %v1388, %v1407
        %v1409 = vrot.slane %v1408, 2
        %v1410 = vadd.f32 %v1408, %v1409
        %v1411 = vrot.slane %v1410, 1
        %v1412 = vadd.f32 %v1410, %v1411
        %s1413 = scalar_lea.vmem %s216, 4
        %1414 = vst.msk [vmem:[%s1413] sm:$0x1] %vm769, %v1394
        %1415 = vst.msk [vmem:[%s1413 + $0x1] sm:$0x1] %vm769, %v1400
        %1416 = vst.msk [vmem:[%s1413 + $0x2] sm:$0x1] %vm769, %v1406
        %1417 = vst.msk [vmem:[%s1413 + $0x3] sm:$0x1] %vm769, %v1412
        %s1418 = sand.u32 %s74, 1
        %s1419 = scalar_lea.sflag [#allocation3], %s1418
        %s1420 = sand.u32 %s74, 1
        %s1421 = smul.addr %s1420, 64
        %s1422 = scalar_lea.vmem [#allocation2], %s1421
        %p1423 = scmp.lt.s32.totalorder %s19, 1
        %s1424 = scalar_select %p1423, %s19, 1
        %s1425 = smul.addr %s1424, 8
        %s1426 = scalar_lea.vmem %s3, %s1425
        %p1427 = scmp.lt.s32.totalorder %s19, 1
        %s1428 = scalar_select %p1427, %s19, 1
        %s1429 = smul.addr %s1428, 8
        %s1430 = scalar_lea.vmem %s4, %s1429
        // Predicated region
        $region29: #{tpu_custom_call.1} parent=27 // pred_check
          %p1431 = pneg %p84
        $region30: #{tpu_custom_call.1} parent=27 // pred_check_branch
          %1433 = sbr.rel (%p1431) target = $region32
        $region31: #{tpu_custom_call.1} parent=27 // pred_region
          %s1435 = ssub.s32 1024, 1024
          %1436 = vsyncadd %s1419, %s1435
          %s1437 = smul.addr %s19, 128
          %s1438 = scalar_lea.hbm %s2, %s1437
          %s1439 = sshll.u32 %s1422, 4
          %s1440 = int_to_ptr.vmem [resolvable:$true] %s1439
          %1445 = dma.vmem_to_hbm [thread:$0]  %s1440, 1024, %s1438, %s1419, 128, 256, 8
        $region32: #{tpu_custom_call.1} parent=27 // pred_fallthru
          _
        // Predicated region
        $region33: #{tpu_custom_call.1} parent=27 // pred_check
          %p1446 = pneg %p110
        $region34: #{tpu_custom_call.1} parent=27 // pred_check_branch
          %1448 = sbr.rel (%p1446) target = $region36
        $region35: #{tpu_custom_call.1} parent=27 // pred_region
          _
        $region36: #{tpu_custom_call.1} parent=27 // pred_fallthru
          _
        // Predicated region
        $region37: #{tpu_custom_call.1} parent=27 // pred_check
          %p1449 = pneg %p136
        $region38: #{tpu_custom_call.1} parent=27 // pred_check_branch
          %1451 = sbr.rel (%p1449) target = $region40
        $region39: #{tpu_custom_call.1} parent=27 // pred_region
          _
        $region40: #{tpu_custom_call.1} parent=27 // pred_fallthru
          _
      $region28: #{tpu_custom_call.1} parent=5 // pred_fallthru
        _
      %p1452 = scmp.le.s32.totalorder 2, %s14
      // Predicated region
      $region41: #{tpu_custom_call.1} parent=5 // pred_check
        %p1453 = pneg %p1452
      $region42: #{tpu_custom_call.1} parent=5 // pred_check_branch
        %1455 = sbr.rel (%p1453) target = $region44
      $region43: #{tpu_custom_call.1} parent=5 // pred_region
        %s1456 = ssub.s32 %s14, 2
        // Predicated region
        $region45: #{tpu_custom_call.1} parent=43 // pred_check
          %p1457 = pneg %p90
        $region46: #{tpu_custom_call.1} parent=43 // pred_check_branch
          %1459 = sbr.rel (%p1457) target = $region48
        $region47: #{tpu_custom_call.1} parent=43 // pred_region
          %s1460 = sand.u32 %s75, 1
          %s1461 = scalar_lea.sflag [#allocation3], %s1460
          %s1462 = sand.u32 %s75, 1
          %s1463 = smul.addr %s1462, 64
          %s1464 = scalar_lea.vmem [#allocation2], %s1463
          %1465 = dma.done %s1461, 1024
        $region48: #{tpu_custom_call.1} parent=43 // pred_fallthru
          _
        // Predicated region
        $region49: #{tpu_custom_call.1} parent=43 // pred_check
          %p1466 = pneg %p116
        $region50: #{tpu_custom_call.1} parent=43 // pred_check_branch
          %1468 = sbr.rel (%p1466) target = $region52
        $region51: #{tpu_custom_call.1} parent=43 // pred_region
          %p1469 = scmp.lt.s32.totalorder %s20, 1
          %s1470 = scalar_select %p1469, %s20, 1
          %s1471 = smul.addr %s1470, 8
          %s1472 = scalar_lea.vmem %s3, %s1471
        $region52: #{tpu_custom_call.1} parent=43 // pred_fallthru
          _
        // Predicated region
        $region53: #{tpu_custom_call.1} parent=43 // pred_check
          %p1473 = pneg %p142
        $region54: #{tpu_custom_call.1} parent=43 // pred_check_branch
          %1475 = sbr.rel (%p1473) target = $region56
        $region55: #{tpu_custom_call.1} parent=43 // pred_region
          %p1476 = scmp.lt.s32.totalorder %s20, 1
          %s1477 = scalar_select %p1476, %s20, 1
          %s1478 = smul.addr %s1477, 8
          %s1479 = scalar_lea.vmem %s4, %s1478
        $region56: #{tpu_custom_call.1} parent=43 // pred_fallthru
          _
      $region44: #{tpu_custom_call.1} parent=5 // pred_fallthru
        _
    $region6: #{tpu_custom_call.1} parent=1 // loop_footer
      %s18 = sadd.s32 1, %s14
    $region7: #{tpu_custom_call.1} parent=1 // loop_footer_branch
      %13 = sbr.rel target = $region3
    $region8: #{tpu_custom_call.1} parent=1 // loop_exit
      _
    %1480 = vsyncpa [#allocation3], 1
    %s1481 = scalar_lea.sflag [#allocation3], 1
    %1482 = vsyncpa %s1481, 1

</llo_original>
